<compile_context>
chip_gen: v6e
topology: v6e:2x2x1
jax: 0.10.0
libtpu: 0.0.40
codegen_flags: <defaults>
</compile_context>

<pallas_src>
import math

import jax
import jax.numpy as jnp
from jax.experimental import pallas as pl
from jax.experimental.pallas import tpu as pltpu

STATE_DIM = 24 + 3 * (3 - 1)   # 24 + 3*(num_agents-1) with 3 agents -> 30
ACTION_DIM = 2
H1 = 800
H2 = 600
PACK_W = H1                    # lane width of the packed small-operand table

# Rows of the per-branch packed small-operand table (shape (8, PACK_W), f32).
_ROW_BS, _ROW_WA0, _ROW_WA1, _ROW_BA, _ROW_WO, _ROW_BO = 0, 1, 2, 3, 4, 5

# Branch-axis dimension semantics, tried in order (winner is remembered).
_BRANCH_DIM_SEMANTICS = [pltpu.CORE_PARALLEL, pltpu.ARBITRARY]


def _critic_branch_kernel(s_ref, a_ref, ws_ref, wh_ref, small_ref, q_ref):
    """One grid step == (one Q-branch, one batch tile)."""
    s = s_ref[...]                          # (TB, STATE_DIM) f32
    a = a_ref[...]                          # (TB, ACTION_DIM) f32
    p = small_ref[...]                      # (8, PACK_W)      f32 packed small ops

    bs = p[_ROW_BS:_ROW_BS + 1, :H1]        # layer_1/4 bias          (1, H1)
    wa0 = p[_ROW_WA0:_ROW_WA0 + 1, :H2]     # layer_2_a/5_a row 0     (1, H2)
    wa1 = p[_ROW_WA1:_ROW_WA1 + 1, :H2]     # layer_2_a/5_a row 1     (1, H2)
    ba = p[_ROW_BA:_ROW_BA + 1, :H2]        # layer_2_a/5_a bias      (1, H2)
    wo = p[_ROW_WO:_ROW_WO + 1, :H2]        # layer_3/6 weight (row)  (1, H2)
    bo = p[_ROW_BO:_ROW_BO + 1, 0:1]        # layer_3/6 bias          (1, 1)

    # layer_1 / layer_4 : f32 MXU matmul (30x800 weight kept in f32).
    h = jnp.dot(s, ws_ref[...], preferred_element_type=jnp.float32) + bs
    h = jnp.maximum(h, 0.0)

    # layer_2_s / layer_5_s : big 800x600 MXU matmul, bf16 operands, f32 acc.
    # (layer_2_s / layer_5_s biases intentionally unused, matching the
    #  torch.mm(...) + layer_2_a.bias reference formulation.)
    z = jnp.dot(h.astype(jnp.bfloat16), wh_ref[...],
                preferred_element_type=jnp.float32)

    # layer_2_a / layer_5_a : K=2 contraction -> VPU broadcast-FMAs (f32).
    z = z + ba + a[:, 0:1] * wa0 + a[:, 1:2] * wa1
    z = jnp.maximum(z, 0.0)

    # layer_3 / layer_6 : N=1 output -> VPU multiply + XLU lane reduction.
    # TODO(synk): for training-size B, emit this lane-dense ((1, TB) output)
    # and consider a bf16 z-epilogue on v6e/v7x if the VALU slot binds.
    q_ref[...] = jnp.sum(z * wo, axis=-1, keepdims=True) + bo


def _pad_rows(x, rows):
    if x.shape[0] == rows:
        return x
    pad = jnp.zeros((rows - x.shape[0],) + x.shape[1:], x.dtype)
    return jnp.concatenate([x, pad], axis=0)


def critic_forward(s, a, params, *, max_batch_tile=256):
    """s: (B, STATE_DIM) f32, a: (B, ACTION_DIM) f32 -> (q1, q2) each (B, 1)."""
    global _BRANCH_DIM_SEMANTICS
    ws, wh, packed = params
    B = s.shape[0]

    # Batch tiling (weight-stationary: branch outermost, batch tiles inner).
    if B <= max_batch_tile:
        tb, b_pad = B, B                     # single tile, no alignment needed
    else:
        tb = max_batch_tile                  # multiple of 8 (256 default)
        b_pad = pl.cdiv(B, tb) * tb
    n_tiles = b_pad // tb
    s_p = _pad_rows(s, b_pad)
    a_p = _pad_rows(a, b_pad)

    # Advisory cost for XLA's scheduler (2 branches).
    flops = 2 * 2 * b_pad * (STATE_DIM * H1 + H1 * H2 + ACTION_DIM * H2 + H2)
    bytes_accessed = int(ws.size * ws.dtype.itemsize
                         + wh.size * wh.dtype.itemsize
                         + packed.size * packed.dtype.itemsize
                         + 2 * (s_p.size + a_p.size) * 4
                         + 2 * b_pad * 4)

    def run(dims):
        call = pl.pallas_call(
            _critic_branch_kernel,
            out_shape=jax.ShapeDtypeStruct((2, b_pad, 1), jnp.float32),
            grid=(2, n_tiles),
            in_specs=[
                pl.BlockSpec((tb, STATE_DIM), lambda b, t: (t, 0)),          # s (shared)
                pl.BlockSpec((tb, ACTION_DIM), lambda b, t: (t, 0)),         # a (shared)
                pl.BlockSpec((None, STATE_DIM, H1), lambda b, t: (b, 0, 0)),  # ws  f32
                pl.BlockSpec((None, H1, H2), lambda b, t: (b, 0, 0)),         # wh  bf16
                pl.BlockSpec((None, 8, PACK_W), lambda b, t: (b, 0, 0)),      # packed
            ],
            out_specs=pl.BlockSpec((None, tb, 1), lambda b, t: (b, t, 0)),
            compiler_params=pltpu.CompilerParams(
                dimension_semantics=dims,
                vmem_limit_bytes=32 << 20),
            cost_estimate=pl.CostEstimate(
                flops=flops, transcendentals=0, bytes_accessed=bytes_accessed),
        )
        return jax.block_until_ready(call(s_p, a_p, ws, wh, packed))

    last_err = None
    out = None
    for idx, sem in enumerate(_BRANCH_DIM_SEMANTICS):
        try:
            out = run((sem, pltpu.ARBITRARY))
            _BRANCH_DIM_SEMANTICS = _BRANCH_DIM_SEMANTICS[idx:]  # remember winner
            break
        except Exception as e:  # fall back if CORE_PARALLEL is unsupported
            last_err = e
    if out is None:
        raise last_err

    return out[0, :B, :], out[1, :B, :]


def _linear_params(key, in_dim, out_dim):
    """PyTorch nn.Linear default init: U(-1/sqrt(in), 1/sqrt(in)).
    Weight is pre-transposed to (in_dim, out_dim); bias is (out_dim,)."""
    kw, kb = jax.random.split(key)
    bound = 1.0 / math.sqrt(in_dim)
    w = jax.random.uniform(kw, (in_dim, out_dim), jnp.float32, -bound, bound)
    b = jax.random.uniform(kb, (out_dim,), jnp.float32, -bound, bound)
    return w, b


def _pack_small(b_s, w_a, b_a, w_o, b_o):
    """Pack the five small per-branch f32 operands into one (8, PACK_W) table."""
    p = jnp.zeros((8, PACK_W), jnp.float32)
    p = p.at[_ROW_BS, :H1].set(b_s)
    p = p.at[_ROW_WA0, :H2].set(w_a[0])
    p = p.at[_ROW_WA1, :H2].set(w_a[1])
    p = p.at[_ROW_BA, :H2].set(b_a)
    p = p.at[_ROW_WO, :H2].set(w_o[:, 0])
    p = p.at[_ROW_BO, 0].set(b_o[0])
    return p


def init_critic_params(key):
    keys = jax.random.split(key, 8)
    w1, b1 = _linear_params(keys[0], STATE_DIM, H1)      # layer_1
    w2s, _ = _linear_params(keys[1], H1, H2)             # layer_2_s (bias unused)
    w2a, b2a = _linear_params(keys[2], ACTION_DIM, H2)   # layer_2_a
    w3, b3 = _linear_params(keys[3], H2, 1)              # layer_3
    w4, b4 = _linear_params(keys[4], STATE_DIM, H1)      # layer_4
    w5s, _ = _linear_params(keys[5], H1, H2)             # layer_5_s (bias unused)
    w5a, b5a = _linear_params(keys[6], ACTION_DIM, H2)   # layer_5_a
    w6, b6 = _linear_params(keys[7], H2, 1)              # layer_6

    ws = jnp.stack([w1, w4])                               # (2, 30, 800)  f32
    wh = jnp.stack([w2s, w5s]).astype(jnp.bfloat16)        # (2, 800, 600) bf16
    packed = jnp.stack([_pack_small(b1, w2a, b2a, w3, b3),
                        _pack_small(b4, w5a, b5a, w6, b6)])  # (2, 8, 800) f32
    return ws, wh, packed


def _reference_forward(s, a, params):
    """Plain-JAX reference with the same (bf16 800x600 weight) numerics."""
    ws, wh, packed = params
    qs = []
    for i in range(2):
        p = packed[i]
        bs, ba, wo = p[_ROW_BS, :H1], p[_ROW_BA, :H2], p[_ROW_WO, :H2]
        wa = p[_ROW_WA0:_ROW_WA1 + 1, :H2]
        bo = p[_ROW_BO, 0]
        h = jax.nn.relu(
            jnp.dot(s, ws[i], precision=jax.lax.Precision.HIGHEST) + bs)
        z = jnp.dot(h.astype(jnp.bfloat16), wh[i],
                    preferred_element_type=jnp.float32)
        z = jax.nn.relu(z + a @ wa + ba)
        qs.append(jnp.sum(z * wo, axis=-1, keepdims=True) + bo)
    return qs[0], qs[1]


if __name__ == "__main__":
    key = jax.random.PRNGKey(0)
    kp, ks, ka = jax.random.split(key, 3)

    params = init_critic_params(kp)

    # Small inference-style batch (single tile).
    B = 2
    s = jax.random.normal(ks, (B, STATE_DIM), jnp.float32)
    a = jax.random.uniform(ka, (B, ACTION_DIM), jnp.float32, -1.0, 1.0)
    q1, q2 = critic_forward(s, a, params)
    q1, q2 = jax.block_until_ready((q1, q2))
    r1, r2 = _reference_forward(s, a, params)
    assert q1.shape == (B, 1) and q2.shape == (B, 1)
    assert jnp.allclose(q1, r1, atol=2e-2, rtol=2e-2)
    assert jnp.allclose(q2, r2, atol=2e-2, rtol=2e-2)

    # Exercise the batch-tiled, weight-stationary path (padding + 4 tiles).
    B2 = 50
    s2 = jax.random.normal(jax.random.PRNGKey(1), (B2, STATE_DIM), jnp.float32)
    a2 = jax.random.uniform(jax.random.PRNGKey(2), (B2, ACTION_DIM),
                            jnp.float32, -1.0, 1.0)
    t1, t2 = critic_forward(s2, a2, params, max_batch_tile=16)
    t1, t2 = jax.block_until_ready((t1, t2))
    u1, u2 = _reference_forward(s2, a2, params)
    assert t1.shape == (B2, 1) and t2.shape == (B2, 1)
    assert jnp.allclose(t1, u1, atol=2e-2, rtol=2e-2)
    assert jnp.allclose(t2, u2, atol=2e-2, rtol=2e-2)

    print("KERNEL_OK")
</pallas_src>

<mosaic_0001>
module attributes {stable_mosaic.version = 11 : i64} {
  func.func @_critic_branch_kernel(%arg0: i32, %arg1: i32, %arg2: memref<2x30xf32, #tpu.memory_space<vmem>>, %arg3: memref<2x2xf32, #tpu.memory_space<vmem>>, %arg4: memref<1x30x800xf32, #tpu.memory_space<vmem>>, %arg5: memref<1x800x600xbf16, #tpu.memory_space<vmem>>, %arg6: memref<1x8x800xf32, #tpu.memory_space<vmem>>, %arg7: memref<1x2x1xf32, #tpu.memory_space<vmem>>) attributes {dimension_semantics = [#tpu.dimension_semantics<core_parallel>, #tpu.dimension_semantics<arbitrary>], iteration_bounds = array<i64: 2, 1>, scalar_prefetch = 0 : i64, scratch_operands = 0 : i64, tpu.core_type = #tpu.core_type<tc>, window_params = [{transform_indices = @transform_0, window_bounds = array<i64: 2, 30>}, {transform_indices = @transform_1, window_bounds = array<i64: 2, 2>}, {transform_indices = @transform_2, window_bounds = array<i64: 1, 30, 800>}, {transform_indices = @transform_3, window_bounds = array<i64: 1, 800, 600>}, {transform_indices = @transform_4, window_bounds = array<i64: 1, 8, 800>}, {transform_indices = @transform_5, window_bounds = array<i64: 1, 2, 1>}]} {
    %c0 = arith.constant 0 : index
    %c0_0 = arith.constant 0 : index
    %0 = vector.load %arg2[%c0, %c0_0] : memref<2x30xf32, #tpu.memory_space<vmem>>, vector<2x30xf32>
    %c0_1 = arith.constant 0 : index
    %c0_2 = arith.constant 0 : index
    %1 = vector.load %arg3[%c0_1, %c0_2] : memref<2x2xf32, #tpu.memory_space<vmem>>, vector<2x2xf32>
    %c0_3 = arith.constant 0 : index
    %c0_4 = arith.constant 0 : index
    %c0_5 = arith.constant 0 : index
    %2 = vector.load %arg6[%c0_3, %c0_4, %c0_5] : memref<1x8x800xf32, #tpu.memory_space<vmem>>, vector<1x8x800xf32>
    %3 = vector.shape_cast %2 : vector<1x8x800xf32> to vector<8x800xf32>
    %4 = vector.extract_strided_slice %3 {offsets = [0, 0], sizes = [1, 800], strides = [1, 1]} : vector<8x800xf32> to vector<1x800xf32>
    %5 = vector.extract_strided_slice %3 {offsets = [1, 0], sizes = [1, 600], strides = [1, 1]} : vector<8x800xf32> to vector<1x600xf32>
    %6 = vector.extract_strided_slice %3 {offsets = [2, 0], sizes = [1, 600], strides = [1, 1]} : vector<8x800xf32> to vector<1x600xf32>
    %7 = vector.extract_strided_slice %3 {offsets = [3, 0], sizes = [1, 600], strides = [1, 1]} : vector<8x800xf32> to vector<1x600xf32>
    %8 = vector.extract_strided_slice %3 {offsets = [4, 0], sizes = [1, 600], strides = [1, 1]} : vector<8x800xf32> to vector<1x600xf32>
    %9 = vector.extract_strided_slice %3 {offsets = [5, 0], sizes = [1, 1], strides = [1, 1]} : vector<8x800xf32> to vector<1x1xf32>
    %c0_6 = arith.constant 0 : index
    %c0_7 = arith.constant 0 : index
    %c0_8 = arith.constant 0 : index
    %10 = vector.load %arg4[%c0_6, %c0_7, %c0_8] : memref<1x30x800xf32, #tpu.memory_space<vmem>>, vector<1x30x800xf32>
    %11 = vector.shape_cast %10 : vector<1x30x800xf32> to vector<30x800xf32>
    %cst = arith.constant dense<0.000000e+00> : vector<2x800xf32>
    %12 = tpu.matmul %0, %11, %cst {dimension_numbers = #tpu.dot_dimension_numbers<[1], [0], [0], [1], [0, 0, 1, 1], [], []>} : vector<2x30xf32>, vector<30x800xf32>, vector<2x800xf32> -> vector<2x800xf32>
    %13 = vector.broadcast %4 : vector<1x800xf32> to vector<2x800xf32>
    %14 = arith.addf %12, %13 : vector<2x800xf32>
    %cst_9 = arith.constant 0.000000e+00 : f32
    %15 = vector.broadcast %cst_9 : f32 to vector<2x800xf32>
    %16 = arith.maximumf %14, %15 : vector<2x800xf32>
    %17 = arith.truncf %16 : vector<2x800xf32> to vector<2x800xbf16>
    %c0_10 = arith.constant 0 : index
    %c0_11 = arith.constant 0 : index
    %c0_12 = arith.constant 0 : index
    %18 = vector.load %arg5[%c0_10, %c0_11, %c0_12] : memref<1x800x600xbf16, #tpu.memory_space<vmem>>, vector<1x800x600xbf16>
    %19 = vector.shape_cast %18 : vector<1x800x600xbf16> to vector<800x600xbf16>
    %cst_13 = arith.constant dense<0.000000e+00> : vector<2x600xf32>
    %20 = tpu.matmul %17, %19, %cst_13 {dimension_numbers = #tpu.dot_dimension_numbers<[1], [0], [0], [1], [0, 0, 1, 1], [], []>} : vector<2x800xbf16>, vector<800x600xbf16>, vector<2x600xf32> -> vector<2x600xf32>
    %21 = vector.broadcast %7 : vector<1x600xf32> to vector<2x600xf32>
    %22 = arith.addf %20, %21 : vector<2x600xf32>
    %23 = vector.extract_strided_slice %1 {offsets = [0, 0], sizes = [2, 1], strides = [1, 1]} : vector<2x2xf32> to vector<2x1xf32>
    %24 = vector.broadcast %23 : vector<2x1xf32> to vector<2x600xf32>
    %25 = vector.broadcast %5 : vector<1x600xf32> to vector<2x600xf32>
    %26 = arith.mulf %24, %25 : vector<2x600xf32>
    %27 = arith.addf %22, %26 : vector<2x600xf32>
    %28 = vector.extract_strided_slice %1 {offsets = [0, 1], sizes = [2, 1], strides = [1, 1]} : vector<2x2xf32> to vector<2x1xf32>
    %29 = vector.broadcast %28 : vector<2x1xf32> to vector<2x600xf32>
    %30 = vector.broadcast %6 : vector<1x600xf32> to vector<2x600xf32>
    %31 = arith.mulf %29, %30 : vector<2x600xf32>
    %32 = arith.addf %27, %31 : vector<2x600xf32>
    %cst_14 = arith.constant 0.000000e+00 : f32
    %33 = vector.broadcast %cst_14 : f32 to vector<2x600xf32>
    %34 = arith.maximumf %32, %33 : vector<2x600xf32>
    %35 = vector.broadcast %8 : vector<1x600xf32> to vector<2x600xf32>
    %36 = arith.mulf %34, %35 : vector<2x600xf32>
    %cst_15 = arith.constant dense<0.000000e+00> : vector<2xf32>
    %37 = vector.multi_reduction <add>, %36, %cst_15 [1] : vector<2x600xf32> to vector<2xf32>
    %38 = vector.shape_cast %37 : vector<2xf32> to vector<2x1xf32>
    %39 = vector.broadcast %9 : vector<1x1xf32> to vector<2x1xf32>
    %40 = arith.addf %38, %39 : vector<2x1xf32>
    %c0_16 = arith.constant 0 : index
    %c0_17 = arith.constant 0 : index
    %c0_18 = arith.constant 0 : index
    %41 = vector.load %arg7[%c0_16, %c0_17, %c0_18] : memref<1x2x1xf32, #tpu.memory_space<vmem>>, vector<1x2x1xf32>
    %42 = vector.shape_cast %41 : vector<1x2x1xf32> to vector<2x1xf32>
    %43 = vector.shape_cast %40 : vector<2x1xf32> to vector<1x2x1xf32>
    tpu.vector_store %arg7[%c0_16, %c0_17, %c0_18], %43 {strides = array<i32>} : memref<1x2x1xf32, #tpu.memory_space<vmem>>, vector<1x2x1xf32>,
    return
  }
  func.func @transform_0(%arg0: i32, %arg1: i32) -> (i32, i32) {
    %c0_i32 = arith.constant 0 : i32
    %c0_i32_0 = arith.constant 0 : i32
    return %arg1, %c0_i32 : i32, i32
  }
  func.func @transform_1(%arg0: i32, %arg1: i32) -> (i32, i32) {
    %c0_i32 = arith.constant 0 : i32
    %c0_i32_0 = arith.constant 0 : i32
    return %arg1, %c0_i32 : i32, i32
  }
  func.func @transform_2(%arg0: i32, %arg1: i32) -> (i32, i32, i32) {
    %c0_i32 = arith.constant 0 : i32
    %c0_i32_0 = arith.constant 0 : i32
    %c0_i32_1 = arith.constant 0 : i32
    return %arg0, %c0_i32, %c0_i32_0 : i32, i32, i32
  }
  func.func @transform_3(%arg0: i32, %arg1: i32) -> (i32, i32, i32) {
    %c0_i32 = arith.constant 0 : i32
    %c0_i32_0 = arith.constant 0 : i32
    %c0_i32_1 = arith.constant 0 : i32
    return %arg0, %c0_i32, %c0_i32_0 : i32, i32, i32
  }
  func.func @transform_4(%arg0: i32, %arg1: i32) -> (i32, i32, i32) {
    %c0_i32 = arith.constant 0 : i32
    %c0_i32_0 = arith.constant 0 : i32
    %c0_i32_1 = arith.constant 0 : i32
    return %arg0, %c0_i32, %c0_i32_0 : i32, i32, i32
  }
  func.func @transform_5(%arg0: i32, %arg1: i32) -> (i32, i32, i32) {
    %c0_i32 = arith.constant 0 : i32
    %c0_i32_0 = arith.constant 0 : i32
    return %arg0, %arg1, %c0_i32 : i32, i32, i32
  }
}

module attributes {stable_mosaic.version = 11 : i64} {
  func.func @_critic_branch_kernel(%arg0: i32, %arg1: i32, %arg2: memref<2x30xf32, #tpu.memory_space<vmem>>, %arg3: memref<2x2xf32, #tpu.memory_space<vmem>>, %arg4: memref<1x30x800xf32, #tpu.memory_space<vmem>>, %arg5: memref<1x800x600xbf16, #tpu.memory_space<vmem>>, %arg6: memref<1x8x800xf32, #tpu.memory_space<vmem>>, %arg7: memref<1x2x1xf32, #tpu.memory_space<vmem>>) attributes {dimension_semantics = [#tpu.dimension_semantics<arbitrary>, #tpu.dimension_semantics<arbitrary>], iteration_bounds = array<i64: 2, 1>, scalar_prefetch = 0 : i64, scratch_operands = 0 : i64, tpu.core_type = #tpu.core_type<tc>, window_params = [{transform_indices = @transform_0, window_bounds = array<i64: 2, 30>}, {transform_indices = @transform_1, window_bounds = array<i64: 2, 2>}, {transform_indices = @transform_2, window_bounds = array<i64: 1, 30, 800>}, {transform_indices = @transform_3, window_bounds = array<i64: 1, 800, 600>}, {transform_indices = @transform_4, window_bounds = array<i64: 1, 8, 800>}, {transform_indices = @transform_5, window_bounds = array<i64: 1, 2, 1>}]} {
    %c0 = arith.constant 0 : index
    %c0_0 = arith.constant 0 : index
    %0 = vector.load %arg2[%c0, %c0_0] : memref<2x30xf32, #tpu.memory_space<vmem>>, vector<2x30xf32>
    %c0_1 = arith.constant 0 : index
    %c0_2 = arith.constant 0 : index
    %1 = vector.load %arg3[%c0_1, %c0_2] : memref<2x2xf32, #tpu.memory_space<vmem>>, vector<2x2xf32>
    %c0_3 = arith.constant 0 : index
    %c0_4 = arith.constant 0 : index
    %c0_5 = arith.constant 0 : index
    %2 = vector.load %arg6[%c0_3, %c0_4, %c0_5] : memref<1x8x800xf32, #tpu.memory_space<vmem>>, vector<1x8x800xf32>
    %3 = vector.shape_cast %2 : vector<1x8x800xf32> to vector<8x800xf32>
    %4 = vector.extract_strided_slice %3 {offsets = [0, 0], sizes = [1, 800], strides = [1, 1]} : vector<8x800xf32> to vector<1x800xf32>
    %5 = vector.extract_strided_slice %3 {offsets = [1, 0], sizes = [1, 600], strides = [1, 1]} : vector<8x800xf32> to vector<1x600xf32>
    %6 = vector.extract_strided_slice %3 {offsets = [2, 0], sizes = [1, 600], strides = [1, 1]} : vector<8x800xf32> to vector<1x600xf32>
    %7 = vector.extract_strided_slice %3 {offsets = [3, 0], sizes = [1, 600], strides = [1, 1]} : vector<8x800xf32> to vector<1x600xf32>
    %8 = vector.extract_strided_slice %3 {offsets = [4, 0], sizes = [1, 600], strides = [1, 1]} : vector<8x800xf32> to vector<1x600xf32>
    %9 = vector.extract_strided_slice %3 {offsets = [5, 0], sizes = [1, 1], strides = [1, 1]} : vector<8x800xf32> to vector<1x1xf32>
    %c0_6 = arith.constant 0 : index
    %c0_7 = arith.constant 0 : index
    %c0_8 = arith.constant 0 : index
    %10 = vector.load %arg4[%c0_6, %c0_7, %c0_8] : memref<1x30x800xf32, #tpu.memory_space<vmem>>, vector<1x30x800xf32>
    %11 = vector.shape_cast %10 : vector<1x30x800xf32> to vector<30x800xf32>
    %cst = arith.constant dense<0.000000e+00> : vector<2x800xf32>
    %12 = tpu.matmul %0, %11, %cst {dimension_numbers = #tpu.dot_dimension_numbers<[1], [0], [0], [1], [0, 0, 1, 1], [], []>} : vector<2x30xf32>, vector<30x800xf32>, vector<2x800xf32> -> vector<2x800xf32>
    %13 = vector.broadcast %4 : vector<1x800xf32> to vector<2x800xf32>
    %14 = arith.addf %12, %13 : vector<2x800xf32>
    %cst_9 = arith.constant 0.000000e+00 : f32
    %15 = vector.broadcast %cst_9 : f32 to vector<2x800xf32>
    %16 = arith.maximumf %14, %15 : vector<2x800xf32>
    %17 = arith.truncf %16 : vector<2x800xf32> to vector<2x800xbf16>
    %c0_10 = arith.constant 0 : index
    %c0_11 = arith.constant 0 : index
    %c0_12 = arith.constant 0 : index
    %18 = vector.load %arg5[%c0_10, %c0_11, %c0_12] : memref<1x800x600xbf16, #tpu.memory_space<vmem>>, vector<1x800x600xbf16>
    %19 = vector.shape_cast %18 : vector<1x800x600xbf16> to vector<800x600xbf16>
    %cst_13 = arith.constant dense<0.000000e+00> : vector<2x600xf32>
    %20 = tpu.matmul %17, %19, %cst_13 {dimension_numbers = #tpu.dot_dimension_numbers<[1], [0], [0], [1], [0, 0, 1, 1], [], []>} : vector<2x800xbf16>, vector<800x600xbf16>, vector<2x600xf32> -> vector<2x600xf32>
    %21 = vector.broadcast %7 : vector<1x600xf32> to vector<2x600xf32>
    %22 = arith.addf %20, %21 : vector<2x600xf32>
    %23 = vector.extract_strided_slice %1 {offsets = [0, 0], sizes = [2, 1], strides = [1, 1]} : vector<2x2xf32> to vector<2x1xf32>
    %24 = vector.broadcast %23 : vector<2x1xf32> to vector<2x600xf32>
    %25 = vector.broadcast %5 : vector<1x600xf32> to vector<2x600xf32>
    %26 = arith.mulf %24, %25 : vector<2x600xf32>
    %27 = arith.addf %22, %26 : vector<2x600xf32>
    %28 = vector.extract_strided_slice %1 {offsets = [0, 1], sizes = [2, 1], strides = [1, 1]} : vector<2x2xf32> to vector<2x1xf32>
    %29 = vector.broadcast %28 : vector<2x1xf32> to vector<2x600xf32>
    %30 = vector.broadcast %6 : vector<1x600xf32> to vector<2x600xf32>
    %31 = arith.mulf %29, %30 : vector<2x600xf32>
    %32 = arith.addf %27, %31 : vector<2x600xf32>
    %cst_14 = arith.constant 0.000000e+00 : f32
    %33 = vector.broadcast %cst_14 : f32 to vector<2x600xf32>
    %34 = arith.maximumf %32, %33 : vector<2x600xf32>
    %35 = vector.broadcast %8 : vector<1x600xf32> to vector<2x600xf32>
    %36 = arith.mulf %34, %35 : vector<2x600xf32>
    %cst_15 = arith.constant dense<0.000000e+00> : vector<2xf32>
    %37 = vector.multi_reduction <add>, %36, %cst_15 [1] : vector<2x600xf32> to vector<2xf32>
    %38 = vector.shape_cast %37 : vector<2xf32> to vector<2x1xf32>
    %39 = vector.broadcast %9 : vector<1x1xf32> to vector<2x1xf32>
    %40 = arith.addf %38, %39 : vector<2x1xf32>
    %c0_16 = arith.constant 0 : index
    %c0_17 = arith.constant 0 : index
    %c0_18 = arith.constant 0 : index
    %41 = vector.load %arg7[%c0_16, %c0_17, %c0_18] : memref<1x2x1xf32, #tpu.memory_space<vmem>>, vector<1x2x1xf32>
    %42 = vector.shape_cast %41 : vector<1x2x1xf32> to vector<2x1xf32>
    %43 = vector.shape_cast %40 : vector<2x1xf32> to vector<1x2x1xf32>
    tpu.vector_store %arg7[%c0_16, %c0_17, %c0_18], %43 {strides = array<i32>} : memref<1x2x1xf32, #tpu.memory_space<vmem>>, vector<1x2x1xf32>,
    return
  }
  func.func @transform_0(%arg0: i32, %arg1: i32) -> (i32, i32) {
    %c0_i32 = arith.constant 0 : i32
    %c0_i32_0 = arith.constant 0 : i32
    return %arg1, %c0_i32 : i32, i32
  }
  func.func @transform_1(%arg0: i32, %arg1: i32) -> (i32, i32) {
    %c0_i32 = arith.constant 0 : i32
    %c0_i32_0 = arith.constant 0 : i32
    return %arg1, %c0_i32 : i32, i32
  }
  func.func @transform_2(%arg0: i32, %arg1: i32) -> (i32, i32, i32) {
    %c0_i32 = arith.constant 0 : i32
    %c0_i32_0 = arith.constant 0 : i32
    %c0_i32_1 = arith.constant 0 : i32
    return %arg0, %c0_i32, %c0_i32_0 : i32, i32, i32
  }
  func.func @transform_3(%arg0: i32, %arg1: i32) -> (i32, i32, i32) {
    %c0_i32 = arith.constant 0 : i32
    %c0_i32_0 = arith.constant 0 : i32
    %c0_i32_1 = arith.constant 0 : i32
    return %arg0, %c0_i32, %c0_i32_0 : i32, i32, i32
  }
  func.func @transform_4(%arg0: i32, %arg1: i32) -> (i32, i32, i32) {
    %c0_i32 = arith.constant 0 : i32
    %c0_i32_0 = arith.constant 0 : i32
    %c0_i32_1 = arith.constant 0 : i32
    return %arg0, %c0_i32, %c0_i32_0 : i32, i32, i32
  }
  func.func @transform_5(%arg0: i32, %arg1: i32) -> (i32, i32, i32) {
    %c0_i32 = arith.constant 0 : i32
    %c0_i32_0 = arith.constant 0 : i32
    return %arg0, %arg1, %c0_i32 : i32, i32, i32
  }
}

</mosaic_0001>

<llo_original>
// kernel: tpu_custom_call.1
$region0: #{tpu_custom_call.1}
  #allocation0 [shape = 'u32[]', space=smem, size = 0x4, offset = 0x4, fixed_abs, tag = 'smem constant byte address 0x4 - core index']
  #allocation1 [shape = 'u32[144,128]{1,0:T(1,128)}', space=vmem, size = 0x12000, scoped, tag = 'internal scratch']
  %s0 = inlined_call_operand.hbm [shape: f32[2,30], index: 0, kind: input, shape index: {}]
  %s1 = inlined_call_operand.hbm [shape: f32[2,2], index: 1, kind: input, shape index: {}]
  %s2 = inlined_call_operand.vmem [shape: f32[2,30,800], index: 2, kind: input, shape index: {}]
  %s3 = inlined_call_operand.hbm [shape: bf16[2,800,600], index: 3, kind: input, shape index: {}]
  %s4 = inlined_call_operand.hbm [shape: f32[2,8,800], index: 4, kind: input, shape index: {}]
  %s5 = inlined_call_operand.vmem [shape: f32[2,2,1], index: 5, kind: output, shape index: {}]
  %s6 = sld [smem:[#allocation0]]
  $region69: #{tpu_custom_call.1} parent=0
    _
  %s8 = ssub.s32 1, %s6
  %s9 = scalar_select 0, %s8, %s6
  $region1: #{tpu_custom_call.1} parent=0
    #allocation2 [shape = 'u8[1024]{0}', space=vmem, size = 0x400, scoped, tag = 'input window, operand 0, single buffered']
    #allocation3 [shape = 's32[2]{0}', space=sflag, size = 0x8, scoped, tag = 'scoped memory for tpu_custom_call.1']
    #allocation4 [shape = 'u8[1024]{0}', space=vmem, size = 0x400, scoped, tag = 'input window, operand 1, single buffered']
    #allocation5 [shape = 's32[1]{0}', space=sflag, size = 0x4, scoped, tag = 'scoped memory for tpu_custom_call.1']
    #allocation6 [shape = 'u8[2048000]{0}', space=vmem, size = 0x1f4000, scoped, tag = 'input window, operand 3']
    #allocation7 [shape = 'u8[57344]{0}', space=vmem, size = 0xe000, scoped, tag = 'input window, operand 4']
    %10 = vsyncpa [#allocation3], 0
    %11 = vsyncpa [#allocation5], 0
    loop: start=0, step=1, limit=4
    $region2: #{tpu_custom_call.1} parent=1 // loop_pre_header
      _
    $region3: #{tpu_custom_call.1} parent=1 // loop_header
      %s13 = sphi 0, %s17
      %p14 = scmp.ge.s32.totalorder %s13, 4
      %s20 = sphi 0, %s32
      %s21 = sphi 0, %s28
      %s22 = sphi 0, %s20
      %s23 = sphi 0, %s21
      %s24 = sphi 0, %s22
      %s25 = sphi 0, %s23
      %s35 = sphi 0, %s37
      %s38 = sphi 0, %s35
      %s39 = sphi 0, %s38
      %s55 = sphi 0, %s39
      %s61 = sphi 0, %s63
      %s64 = sphi 0, %s61
      %s65 = sphi 0, %s64
      %s81 = sphi 0, %s65
      %s87 = sphi 0, %s89
      %s90 = sphi 0, %s87
      %s91 = sphi 0, %s90
      %s107 = sphi 0, %s91
      %s113 = sphi 0, %s115
      %s116 = sphi 0, %s113
      %s117 = sphi 0, %s116
      %s133 = sphi 0, %s117
      %s139 = sphi 0, %s141
      %s142 = sphi 0, %s139
      %s143 = sphi 0, %s142
      %s159 = sphi 0, %s143
      %s167 = sphi 0, %s169
      %s170 = sphi 0, %s167
      %s171 = sphi 0, %s170
      %s187 = sphi 0, %s171
    $region4: #{tpu_custom_call.1} parent=1 // loop_header_branch
      %16 = sbr.rel (%p14) target = $region8
    $region5: #{tpu_custom_call.1} parent=1 // loop_body
      %s18 = ssub.s32 %s13, 1
      %s19 = ssub.s32 %s13, 2
      %s26 = sadd.s32 1, %s21
      %p27 = scmp.ge.s32.totalorder %s26, 1
      %s28 = scalar_select %p27, 0, %s26
      %s29 = sadd.s32 1, %s20
      %s30 = scalar_select %p27, %s29, %s20
      %p31 = scmp.ge.s32.totalorder %s30, 2
      %s32 = scalar_select %p31, 0, %s30
      %s33 = ssub.s32 %s21, %s28
      %p34 = scmp.eq.s32.totalorder %s33, 0
      %s36 = sadd.s32 %s35, 1
      %s37 = scalar_select %p34, %s35, %s36
      %p40 = pneg %p34
      %p41 = scmp.eq.s32.totalorder %s13, 1
      %p42 = por %p40, %p41
      %p43 = scmp.ne.s32.totalorder %s35, %s38
      %p44 = scmp.eq.s32.totalorder %s13, 0
      %p45 = por %p43, %p44
      %p46 = scmp.ne.s32.totalorder %s35, %s38
      %p47 = scmp.eq.s32.totalorder %s18, 1
      %p48 = por %p46, %p47
      %p49 = scmp.ne.s32.totalorder %s38, %s39
      %p50 = scmp.eq.s32.totalorder %s18, 0
      %p51 = por %p49, %p50
      %p52 = scmp.ne.s32.totalorder %s38, %s39
      %p53 = scmp.eq.s32.totalorder %s19, 1
      %p54 = por %p52, %p53
      %p56 = scmp.ne.s32.totalorder %s39, %s55
      %p57 = scmp.eq.s32.totalorder %s19, 0
      %p58 = por %p56, %p57
      %s59 = ssub.s32 %s21, %s28
      %p60 = scmp.eq.s32.totalorder %s59, 0
      %s62 = sadd.s32 %s61, 1
      %s63 = scalar_select %p60, %s61, %s62
      %p66 = pneg %p60
      %p67 = scmp.eq.s32.totalorder %s13, 1
      %p68 = por %p66, %p67
      %p69 = scmp.ne.s32.totalorder %s61, %s64
      %p70 = scmp.eq.s32.totalorder %s13, 0
      %p71 = por %p69, %p70
      %p72 = scmp.ne.s32.totalorder %s61, %s64
      %p73 = scmp.eq.s32.totalorder %s18, 1
      %p74 = por %p72, %p73
      %p75 = scmp.ne.s32.totalorder %s64, %s65
      %p76 = scmp.eq.s32.totalorder %s18, 0
      %p77 = por %p75, %p76
      %p78 = scmp.ne.s32.totalorder %s64, %s65
      %p79 = scmp.eq.s32.totalorder %s19, 1
      %p80 = por %p78, %p79
      %p82 = scmp.ne.s32.totalorder %s65, %s81
      %p83 = scmp.eq.s32.totalorder %s19, 0
      %p84 = por %p82, %p83
      %s85 = ssub.s32 %s20, %s32
      %p86 = scmp.eq.s32.totalorder %s85, 0
      %s88 = sadd.s32 %s87, 1
      %s89 = scalar_select %p86, %s87, %s88
      %p92 = pneg %p86
      %p93 = scmp.eq.s32.totalorder %s13, 1
      %p94 = por %p92, %p93
      %p95 = scmp.ne.s32.totalorder %s87, %s90
      %p96 = scmp.eq.s32.totalorder %s13, 0
      %p97 = por %p95, %p96
      %p98 = scmp.ne.s32.totalorder %s87, %s90
      %p99 = scmp.eq.s32.totalorder %s18, 1
      %p100 = por %p98, %p99
      %p101 = scmp.ne.s32.totalorder %s90, %s91
      %p102 = scmp.eq.s32.totalorder %s18, 0
      %p103 = por %p101, %p102
      %p104 = scmp.ne.s32.totalorder %s90, %s91
      %p105 = scmp.eq.s32.totalorder %s19, 1
      %p106 = por %p104, %p105
      %p108 = scmp.ne.s32.totalorder %s91, %s107
      %p109 = scmp.eq.s32.totalorder %s19, 0
      %p110 = por %p108, %p109
      %s111 = ssub.s32 %s20, %s32
      %p112 = scmp.eq.s32.totalorder %s111, 0
      %s114 = sadd.s32 %s113, 1
      %s115 = scalar_select %p112, %s113, %s114
      %p118 = pneg %p112
      %p119 = scmp.eq.s32.totalorder %s13, 1
      %p120 = por %p118, %p119
      %p121 = scmp.ne.s32.totalorder %s113, %s116
      %p122 = scmp.eq.s32.totalorder %s13, 0
      %p123 = por %p121, %p122
      %p124 = scmp.ne.s32.totalorder %s113, %s116
      %p125 = scmp.eq.s32.totalorder %s18, 1
      %p126 = por %p124, %p125
      %p127 = scmp.ne.s32.totalorder %s116, %s117
      %p128 = scmp.eq.s32.totalorder %s18, 0
      %p129 = por %p127, %p128
      %p130 = scmp.ne.s32.totalorder %s116, %s117
      %p131 = scmp.eq.s32.totalorder %s19, 1
      %p132 = por %p130, %p131
      %p134 = scmp.ne.s32.totalorder %s117, %s133
      %p135 = scmp.eq.s32.totalorder %s19, 0
      %p136 = por %p134, %p135
      %s137 = ssub.s32 %s20, %s32
      %p138 = scmp.eq.s32.totalorder %s137, 0
      %s140 = sadd.s32 %s139, 1
      %s141 = scalar_select %p138, %s139, %s140
      %p144 = pneg %p138
      %p145 = scmp.eq.s32.totalorder %s13, 1
      %p146 = por %p144, %p145
      %p147 = scmp.ne.s32.totalorder %s139, %s142
      %p148 = scmp.eq.s32.totalorder %s13, 0
      %p149 = por %p147, %p148
      %p150 = scmp.ne.s32.totalorder %s139, %s142
      %p151 = scmp.eq.s32.totalorder %s18, 1
      %p152 = por %p150, %p151
      %p153 = scmp.ne.s32.totalorder %s142, %s143
      %p154 = scmp.eq.s32.totalorder %s18, 0
      %p155 = por %p153, %p154
      %p156 = scmp.ne.s32.totalorder %s142, %s143
      %p157 = scmp.eq.s32.totalorder %s19, 1
      %p158 = por %p156, %p157
      %p160 = scmp.ne.s32.totalorder %s143, %s159
      %p161 = scmp.eq.s32.totalorder %s19, 0
      %p162 = por %p160, %p161
      %s163 = ssub.s32 %s20, %s32
      %s164 = ssub.s32 %s21, %s28
      %s165 = sor.u32 %s163, %s164
      %p166 = scmp.eq.s32.totalorder %s165, 0
      %s168 = sadd.s32 %s167, 1
      %s169 = scalar_select %p166, %s167, %s168
      %p172 = pneg %p166
      %p173 = scmp.eq.s32.totalorder %s13, 1
      %p174 = por %p172, %p173
      %p175 = scmp.ne.s32.totalorder %s167, %s170
      %p176 = scmp.eq.s32.totalorder %s13, 0
      %p177 = por %p175, %p176
      %p178 = scmp.ne.s32.totalorder %s167, %s170
      %p179 = scmp.eq.s32.totalorder %s18, 1
      %p180 = por %p178, %p179
      %p181 = scmp.ne.s32.totalorder %s170, %s171
      %p182 = scmp.eq.s32.totalorder %s18, 0
      %p183 = por %p181, %p182
      %p184 = scmp.ne.s32.totalorder %s170, %s171
      %p185 = scmp.eq.s32.totalorder %s19, 1
      %p186 = por %p184, %p185
      %p188 = scmp.ne.s32.totalorder %s171, %s187
      %p189 = scmp.eq.s32.totalorder %s19, 0
      %p190 = por %p188, %p189
      %p191 = scmp.le.s32.totalorder 1, %s13
      %p192 = scmp.lt.s32.totalorder %s13, 3
      %p193 = pnand %p191, %p192
      %p194 = pneg %p193
      // Predicated region
      $region9: #{tpu_custom_call.1} parent=5 // pred_check
        _
      $region10: #{tpu_custom_call.1} parent=5 // pred_check_branch
        %196 = sbr.rel (%p193) target = $region12
      $region11: #{tpu_custom_call.1} parent=5 // pred_region
        %s197 = ssub.s32 %s13, 1
        // Predicated region
        $region13: #{tpu_custom_call.1} parent=11 // pred_check
          %p198 = pneg %p51
        $region14: #{tpu_custom_call.1} parent=11 // pred_check_branch
          %200 = sbr.rel (%p198) target = $region16
        $region15: #{tpu_custom_call.1} parent=11 // pred_region
          %s202 = ssub.s32 32, 32
          %203 = vsyncadd [#allocation3], %s202
          %s204 = smul.addr %s23, 32
          %s205 = scalar_lea.hbm %s0, %s204
          %s207 = sshll.u32 [#allocation2], 4
          %s208 = int_to_ptr.vmem [resolvable:$true] %s207
          %210 = dma.hbm_to_vmem [thread:$0]  %s205, 32, %s208, [#allocation3]
        $region16: #{tpu_custom_call.1} parent=11 // pred_fallthru
          _
        // Predicated region
        $region17: #{tpu_custom_call.1} parent=11 // pred_check
          %p211 = pneg %p77
        $region18: #{tpu_custom_call.1} parent=11 // pred_check_branch
          %213 = sbr.rel (%p211) target = $region20
        $region19: #{tpu_custom_call.1} parent=11 // pred_region
          %s215 = ssub.s32 32, 32
          %216 = vsyncadd [#allocation5], %s215
          %s217 = smul.addr %s23, 32
          %s218 = scalar_lea.hbm %s1, %s217
          %s220 = sshll.u32 [#allocation4], 4
          %s221 = int_to_ptr.vmem [resolvable:$true] %s220
          %223 = dma.hbm_to_vmem [thread:$0]  %s218, 32, %s221, [#allocation5]
        $region20: #{tpu_custom_call.1} parent=11 // pred_fallthru
          _
      $region12: #{tpu_custom_call.1} parent=5 // pred_fallthru
        _
      %p224 = scmp.lt.s32.totalorder %s13, 2
      // Predicated region
      $region21: #{tpu_custom_call.1} parent=5 // pred_check
        %p225 = pneg %p224
      $region22: #{tpu_custom_call.1} parent=5 // pred_check_branch
        %227 = sbr.rel (%p225) target = $region24
      $region23: #{tpu_custom_call.1} parent=5 // pred_region
        // Predicated region
        $region25: #{tpu_custom_call.1} parent=23 // pred_check
          %p228 = pneg %p97
        $region26: #{tpu_custom_call.1} parent=23 // pred_check_branch
          %230 = sbr.rel (%p228) target = $region28
        $region27: #{tpu_custom_call.1} parent=23 // pred_region
          %p231 = scmp.lt.s32.totalorder %s20, 1
          %s232 = scalar_select %p231, %s20, 1
          %s233 = smul.addr %s232, 28
          %s234 = smul.addr %s233, 8
          %s235 = scalar_lea.vmem %s2, %s234
        $region28: #{tpu_custom_call.1} parent=23 // pred_fallthru
          _
        // Predicated region
        $region29: #{tpu_custom_call.1} parent=23 // pred_check
          %p236 = pneg %p123
        $region30: #{tpu_custom_call.1} parent=23 // pred_check_branch
          %238 = sbr.rel (%p236) target = $region32
        $region31: #{tpu_custom_call.1} parent=23 // pred_region
          %s239 = sand.u32 %s13, 1
          %s240 = scalar_lea.sflag [#allocation3], %s239
          %s241 = sand.u32 %s113, 1
          %s242 = smul.addr %s241, 2000
          %s243 = scalar_lea.vmem [#allocation6], %s242
          %s245 = ssub.s32 32000, 32000
          %246 = vsyncadd %s240, %s245
          %s247 = smul.addr %s20, 500
          %s248 = smul.addr %s247, 64
          %s249 = scalar_lea.hbm %s3, %s248
          %s250 = sshll.u32 %s243, 4
          %s251 = int_to_ptr.vmem [resolvable:$true] %s250
          %256 = dma.hbm_to_vmem [thread:$0]  %s249, 32000, %s251, %s240, 320, 320, 20
        $region32: #{tpu_custom_call.1} parent=23 // pred_fallthru
          _
        // Predicated region
        $region33: #{tpu_custom_call.1} parent=23 // pred_check
          %p257 = pneg %p149
        $region34: #{tpu_custom_call.1} parent=23 // pred_check_branch
          %259 = sbr.rel (%p257) target = $region36
        $region35: #{tpu_custom_call.1} parent=23 // pred_region
          %s260 = sand.u32 %s13, 1
          %s261 = scalar_lea.sflag [#allocation3], %s260
          %s262 = sand.u32 %s139, 1
          %s263 = smul.addr %s262, 56
          %s264 = scalar_lea.vmem [#allocation7], %s263
          %s266 = ssub.s32 896, 896
          %267 = vsyncadd %s261, %s266
          %s268 = smul.addr %s20, 7
          %s269 = smul.addr %s268, 128
          %s270 = scalar_lea.hbm %s4, %s269
          %s272 = sshll.u32 %s264, 4
          %s273 = int_to_ptr.vmem [resolvable:$true] %s272
          %275 = dma.hbm_to_vmem [thread:$0]  %s270, 896, %s273, %s261
        $region36: #{tpu_custom_call.1} parent=23 // pred_fallthru
          _
      $region24: #{tpu_custom_call.1} parent=5 // pred_fallthru
        _
      %p276 = scmp.le.s32.totalorder 1, %s13
      %p277 = scmp.lt.s32.totalorder %s13, 3
      %p278 = pnand %p276, %p277
      %p279 = pneg %p278
      // Predicated region
      $region37: #{tpu_custom_call.1} parent=5 // pred_check
        _
      $region38: #{tpu_custom_call.1} parent=5 // pred_check_branch
        %281 = sbr.rel (%p278) target = $region40
      $region39: #{tpu_custom_call.1} parent=5 // pred_region
        %s282 = ssub.s32 %s13, 1
        // Predicated region
        $region41: #{tpu_custom_call.1} parent=39 // pred_check
          %p283 = pneg %p51
        $region42: #{tpu_custom_call.1} parent=39 // pred_check_branch
          %285 = sbr.rel (%p283) target = $region44
        $region43: #{tpu_custom_call.1} parent=39 // pred_region
          %286 = dma.done [#allocation3], 32
        $region44: #{tpu_custom_call.1} parent=39 // pred_fallthru
          _
        // Predicated region
        $region45: #{tpu_custom_call.1} parent=39 // pred_check
          %p287 = pneg %p77
        $region46: #{tpu_custom_call.1} parent=39 // pred_check_branch
          %289 = sbr.rel (%p287) target = $region48
        $region47: #{tpu_custom_call.1} parent=39 // pred_region
          %290 = dma.done [#allocation5], 32
        $region48: #{tpu_custom_call.1} parent=39 // pred_fallthru
          _
        %s291 = sand.u32 %s18, 1
        %s292 = scalar_lea.sflag [#allocation3], %s291
        %s293 = sand.u32 %s116, 1
        %s294 = smul.addr %s293, 2000
        %s295 = scalar_lea.vmem [#allocation6], %s294
        // Predicated region
        $region49: #{tpu_custom_call.1} parent=39 // pred_check
          %p296 = pneg %p129
        $region50: #{tpu_custom_call.1} parent=39 // pred_check_branch
          %298 = sbr.rel (%p296) target = $region52
        $region51: #{tpu_custom_call.1} parent=39 // pred_region
          %299 = dma.done %s292, 32000
        $region52: #{tpu_custom_call.1} parent=39 // pred_fallthru
          _
        %s300 = sand.u32 %s18, 1
        %s301 = scalar_lea.sflag [#allocation3], %s300
        %s302 = sand.u32 %s142, 1
        %s303 = smul.addr %s302, 56
        %s304 = scalar_lea.vmem [#allocation7], %s303
        // Predicated region
        $region53: #{tpu_custom_call.1} parent=39 // pred_check
          %p305 = pneg %p155
        $region54: #{tpu_custom_call.1} parent=39 // pred_check_branch
          %307 = sbr.rel (%p305) target = $region56
        $region55: #{tpu_custom_call.1} parent=39 // pred_region
          %308 = dma.done %s301, 896
        $region56: #{tpu_custom_call.1} parent=39 // pred_fallthru
          _
        %p309 = pneg %p51
        %p310 = pneg %p48
        %p311 = pneg %p77
        %p312 = pneg %p74
        %p313 = scmp.lt.s32.totalorder %s22, 1
        %s314 = scalar_select %p313, %s22, 1
        %s315 = smul.addr %s314, 28
        %s316 = smul.addr %s315, 8
        %s317 = scalar_lea.vmem %s2, %s316
        %p318 = pneg %p103
        %p319 = pneg %p100
        %s320 = sand.u32 %s18, 1
        %s321 = scalar_lea.sflag [#allocation3], %s320
        %s322 = sand.u32 %s116, 1
        %s323 = smul.addr %s322, 2000
        %s324 = scalar_lea.vmem [#allocation6], %s323
        %p325 = pneg %p129
        %p326 = pneg %p126
        %s327 = sand.u32 %s18, 1
        %s328 = scalar_lea.sflag [#allocation3], %s327
        %s329 = sand.u32 %s142, 1
        %s330 = smul.addr %s329, 56
        %s331 = scalar_lea.vmem [#allocation7], %s330
        %p332 = pneg %p155
        %p333 = pneg %p152
        %p334 = pneg %p183
        %p335 = pneg %p180
        %p336 = scmp.lt.s32.totalorder %s22, 1
        %s337 = scalar_select %p336, %s22, 1
        %p338 = scmp.lt.s32.totalorder %s23, 0
        %s339 = scalar_select %p338, %s23, 0
        %s340 = sadd.s32 %s339, %s337
        %s341 = smul.addr %s340, 2
        %s342 = scalar_lea.vmem %s5, %s341
        %p343 = scmp.lt.s32.totalorder %s22, 1
        %s344 = scalar_select %p343, %s22, 1
        %s345 = smul.addr %s344, 28
        %s346 = smul.addr %s345, 8
        %s347 = scalar_lea.vmem %s2, %s346
        %p348 = scmp.lt.s32.totalorder %s22, 1
        %s349 = scalar_select %p348, %s22, 1
        %p350 = scmp.lt.s32.totalorder %s23, 0
        %s351 = scalar_select %p350, %s23, 0
        %s352 = sadd.s32 %s351, %s349
        %s353 = smul.addr %s352, 2
        %s354 = scalar_lea.vmem %s5, %s353
        %v356 = vld [vmem:[#allocation2] sm:$0x3]
        %v357 = vld [vmem:[#allocation4] sm:$0x3]
        %v358 = vld [vmem:[%s304] sm:$0xff]
        %v359 = vld [vmem:[%s304 + $0x8] sm:$0xff]
        %v360 = vld [vmem:[%s304 + $0x10] sm:$0xff]
        %v361 = vld [vmem:[%s304 + $0x18] sm:$0xff]
        %v362 = vld [vmem:[%s304 + $0x20] sm:$0xff]
        %v363 = vld [vmem:[%s304 + $0x28] sm:$0xff]
        %v364 = vld [vmem:[%s304 + $0x30] sm:$0xff]
        %v365 = vld [vmem:[%s347] sm:$0xff]
        %v366 = vld [vmem:[%s347 + $0x8] sm:$0xff]
        %v367 = vld [vmem:[%s347 + $0x10] sm:$0xff]
        %v368 = vld [vmem:[%s347 + $0x18] sm:$0xff]
        %v369 = vld [vmem:[%s347 + $0x20] sm:$0xff]
        %v370 = vld [vmem:[%s347 + $0x28] sm:$0xff]
        %v371 = vld [vmem:[%s347 + $0x30] sm:$0xff]
        %v372 = vld [vmem:[%s347 + $0x38] sm:$0xff]
        %v373 = vld [vmem:[%s347 + $0x40] sm:$0xff]
        %v374 = vld [vmem:[%s347 + $0x48] sm:$0xff]
        %v375 = vld [vmem:[%s347 + $0x50] sm:$0xff]
        %v376 = vld [vmem:[%s347 + $0x58] sm:$0xff]
        %v377 = vld [vmem:[%s347 + $0x60] sm:$0xff]
        %v378 = vld [vmem:[%s347 + $0x68] sm:$0xff]
        %v379 = vld [vmem:[%s347 + $0x70] sm:$0xff]
        %v380 = vld [vmem:[%s347 + $0x78] sm:$0xff]
        %v381 = vld [vmem:[%s347 + $0x80] sm:$0xff]
        %v382 = vld [vmem:[%s347 + $0x88] sm:$0xff]
        %v383 = vld [vmem:[%s347 + $0x90] sm:$0xff]
        %v384 = vld [vmem:[%s347 + $0x98] sm:$0xff]
        %v385 = vld [vmem:[%s347 + $0xa0] sm:$0xff]
        %v386 = vld [vmem:[%s347 + $0xa8] sm:$0x3f]
        %v387 = vld [vmem:[%s347 + $0xb0] sm:$0x3f]
        %v388 = vld [vmem:[%s347 + $0xb8] sm:$0x3f]
        %v389 = vld [vmem:[%s347 + $0xc0] sm:$0x3f]
        %v390 = vld [vmem:[%s347 + $0xc8] sm:$0x3f]
        %v391 = vld [vmem:[%s347 + $0xd0] sm:$0x3f]
        %v392 = vld [vmem:[%s347 + $0xd8] sm:$0x3f]
        %v393 = vlaneseq
        %v394 = vshrl.u32 %v393, 7
        %v395 = vsub.s32 0, %v394
        %v396 = vrot.slane %v358, %v395
        %v397 = vlaneseq
        %v398 = vshrl.u32 %v397, 7
        %v399 = vsub.s32 0, %v398
        %v400 = vrot.slane %v359, %v399
        %v401 = vlaneseq
        %v402 = vshrl.u32 %v401, 7
        %v403 = vsub.s32 0, %v402
        %v404 = vrot.slane %v360, %v403
        %v405 = vlaneseq
        %v406 = vshrl.u32 %v405, 7
        %v407 = vsub.s32 0, %v406
        %v408 = vrot.slane %v361, %v407
        %v409 = vlaneseq
        %v410 = vshrl.u32 %v409, 7
        %v411 = vsub.s32 0, %v410
        %v412 = vrot.slane %v362, %v411
        %v413 = vlaneseq
        %v414 = vshrl.u32 %v413, 7
        %v415 = vsub.s32 0, %v414
        %v416 = vrot.slane %v363, %v415
        %v417 = vlaneseq
        %v418 = vshrl.u32 %v417, 7
        %v419 = vsub.s32 0, %v418
        %v420 = vrot.slane %v364, %v419
        %vm421 = vcmask 244736
        %v423 = vsel %vm421, %v356, 0
        %vm425 = vcmask 1045504
        %v427 = vsel %vm425, %v386, 0
        %v430 = vsel %vm425, %v387, 0
        %v433 = vsel %vm425, %v388, 0
        %v436 = vsel %vm425, %v389, 0
        %v439 = vsel %vm425, %v390, 0
        %v442 = vsel %vm425, %v391, 0
        %v445 = vsel %vm425, %v392, 0
        %447 = vmatprep.subr.mxu0 0.0
        %448 = vmatpush1.msra.mxu0 0.0
        %449 = vmatprep.subr.mxu0 0.0
        %450 = vmatpush1.msra.mxu0 0.0
        %451 = vmatprep.subr.mxu0 0.0
        %452 = vmatpush1.msra.mxu0 0.0
        %453 = vmatprep.subr.mxu0 0.0
        %454 = vmatpush1.msra.mxu0 0.0
        %455 = vmatprep.subr.mxu0 0.0
        %456 = vmatpush1.msra.mxu0 0.0
        %457 = vmatprep.subr.mxu0 0.0
        %458 = vmatpush1.msra.mxu0 0.0
        %459 = vmatprep.subr.mxu0 0.0
        %460 = vmatpush1.msra.mxu0 0.0
        %461 = vmatprep.subr.mxu0 0.0
        %462 = vmatpush1.msra.mxu0 0.0
        %463 = vmatprep.subr.mxu0 0.0
        %464 = vmatpush1.msra.mxu0 0.0
        %465 = vmatprep.subr.mxu0 0.0
        %466 = vmatpush1.msra.mxu0 0.0
        %467 = vmatprep.subr.mxu0 0.0
        %468 = vmatpush1.msra.mxu0 0.0
        %469 = vmatprep.subr.mxu0 0.0
        %470 = vmatpush1.msra.mxu0 0.0
        %471 = vmatprep.subr.mxu0 %v430
        %472 = vmatpush1.msra.mxu0 %v427
        %473 = vmatprep.subr.mxu0 %v380
        %474 = vmatpush1.msra.mxu0 %v379
        %475 = vmatprep.subr.mxu0 %v373
        %476 = vmatpush1.msra.mxu0 %v372
        %477 = vmatprep.subr.mxu0 %v366
        %478 = vmatpush1.msra.mxu0 %v365
        %479 = vmatprep.subr.mxu0 0.0
        %480 = vmatpush2.msra.mxu0 0.0
        %481 = vmatprep.subr.mxu0 0.0
        %482 = vmatpush2.msra.mxu0 0.0
        %483 = vmatprep.subr.mxu0 0.0
        %484 = vmatpush2.msra.mxu0 0.0
        %485 = vmatprep.subr.mxu0 0.0
        %486 = vmatpush2.msra.mxu0 0.0
        %487 = vmatprep.subr.mxu0 0.0
        %488 = vmatpush2.msra.mxu0 0.0
        %489 = vmatprep.subr.mxu0 0.0
        %490 = vmatpush2.msra.mxu0 0.0
        %491 = vmatprep.subr.mxu0 0.0
        %492 = vmatpush2.msra.mxu0 0.0
        %493 = vmatprep.subr.mxu0 0.0
        %494 = vmatpush2.msra.mxu0 0.0
        %495 = vmatprep.subr.mxu0 0.0
        %496 = vmatpush2.msra.mxu0 0.0
        %497 = vmatprep.subr.mxu0 0.0
        %498 = vmatpush2.msra.mxu0 0.0
        %499 = vmatprep.subr.mxu0 0.0
        %500 = vmatpush2.msra.mxu0 0.0
        %501 = vmatprep.subr.mxu0 0.0
        %502 = vmatpush2.msra.mxu0 0.0
        %503 = vmatprep.subr.mxu0 0.0
        %504 = vmatpush2.msra.mxu0 0.0
        %505 = vmatprep.subr.mxu0 0.0
        %506 = vmatpush2.msra.mxu0 0.0
        %507 = vmatprep.subr.mxu0 0.0
        %508 = vmatpush2.msra.mxu0 0.0
        %509 = vmatprep.subr.mxu0 0.0
        %510 = vmatpush2.msra.mxu0 0.0
        %511 = vmatprep.mubr.f32.mxu0 0.0
        %512 = vmatmul.mubr.f32.gmra.mxu0 %v423
        %v513 = vpop.f32.mrf.mxu0
        %v514 = vadd.f32 %v396, %v513
        %v515 = vpop.f32.mrf.mxu0
        %v516 = vadd.f32 %v400, %v515
        %517 = vdwg.mxu0
        %518 = vmatprep.subr.mxu0 0.0
        %519 = vmatpush1.msra.mxu0 0.0
        %520 = vmatprep.subr.mxu0 0.0
        %521 = vmatpush1.msra.mxu0 0.0
        %522 = vmatprep.subr.mxu0 0.0
        %523 = vmatpush1.msra.mxu0 0.0
        %524 = vmatprep.subr.mxu0 0.0
        %525 = vmatpush1.msra.mxu0 0.0
        %526 = vmatprep.subr.mxu0 0.0
        %527 = vmatpush1.msra.mxu0 0.0
        %528 = vmatprep.subr.mxu0 0.0
        %529 = vmatpush1.msra.mxu0 0.0
        %530 = vmatprep.subr.mxu0 0.0
        %531 = vmatpush1.msra.mxu0 0.0
        %532 = vmatprep.subr.mxu0 0.0
        %533 = vmatpush1.msra.mxu0 0.0
        %534 = vmatprep.subr.mxu0 0.0
        %535 = vmatpush1.msra.mxu0 0.0
        %536 = vmatprep.subr.mxu0 0.0
        %537 = vmatpush1.msra.mxu0 0.0
        %538 = vmatprep.subr.mxu0 0.0
        %539 = vmatpush1.msra.mxu0 0.0
        %540 = vmatprep.subr.mxu0 0.0
        %541 = vmatpush1.msra.mxu0 0.0
        %542 = vmatprep.subr.mxu0 %v436
        %543 = vmatpush1.msra.mxu0 %v433
        %544 = vmatprep.subr.mxu0 %v382
        %545 = vmatpush1.msra.mxu0 %v381
        %546 = vmatprep.subr.mxu0 %v375
        %547 = vmatpush1.msra.mxu0 %v374
        %548 = vmatprep.subr.mxu0 %v368
        %549 = vmatpush1.msra.mxu0 %v367
        %550 = vmatprep.subr.mxu0 0.0
        %551 = vmatpush2.msra.mxu0 0.0
        %552 = vmatprep.subr.mxu0 0.0
        %553 = vmatpush2.msra.mxu0 0.0
        %554 = vmatprep.subr.mxu0 0.0
        %555 = vmatpush2.msra.mxu0 0.0
        %556 = vmatprep.subr.mxu0 0.0
        %557 = vmatpush2.msra.mxu0 0.0
        %558 = vmatprep.subr.mxu0 0.0
        %559 = vmatpush2.msra.mxu0 0.0
        %560 = vmatprep.subr.mxu0 0.0
        %561 = vmatpush2.msra.mxu0 0.0
        %562 = vmatprep.subr.mxu0 0.0
        %563 = vmatpush2.msra.mxu0 0.0
        %564 = vmatprep.subr.mxu0 0.0
        %565 = vmatpush2.msra.mxu0 0.0
        %566 = vmatprep.subr.mxu0 0.0
        %567 = vmatpush2.msra.mxu0 0.0
        %568 = vmatprep.subr.mxu0 0.0
        %569 = vmatpush2.msra.mxu0 0.0
        %570 = vmatprep.subr.mxu0 0.0
        %571 = vmatpush2.msra.mxu0 0.0
        %572 = vmatprep.subr.mxu0 0.0
        %573 = vmatpush2.msra.mxu0 0.0
        %574 = vmatprep.subr.mxu0 0.0
        %575 = vmatpush2.msra.mxu0 0.0
        %576 = vmatprep.subr.mxu0 0.0
        %577 = vmatpush2.msra.mxu0 0.0
        %578 = vmatprep.subr.mxu0 0.0
        %579 = vmatpush2.msra.mxu0 0.0
        %580 = vmatprep.subr.mxu0 0.0
        %581 = vmatpush2.msra.mxu0 0.0
        %582 = vmatprep.mubr.f32.mxu0 0.0
        %583 = vmatmul.mubr.f32.gmra.mxu0 %v423
        %v584 = vpop.f32.mrf.mxu0
        %v585 = vadd.f32 %v404, %v584
        %v586 = vpop.f32.mrf.mxu0
        %v587 = vadd.f32 %v408, %v586
        %588 = vdwg.mxu0
        %589 = vmatprep.subr.mxu0 0.0
        %590 = vmatpush1.msra.mxu0 0.0
        %591 = vmatprep.subr.mxu0 0.0
        %592 = vmatpush1.msra.mxu0 0.0
        %593 = vmatprep.subr.mxu0 0.0
        %594 = vmatpush1.msra.mxu0 0.0
        %595 = vmatprep.subr.mxu0 0.0
        %596 = vmatpush1.msra.mxu0 0.0
        %597 = vmatprep.subr.mxu0 0.0
        %598 = vmatpush1.msra.mxu0 0.0
        %599 = vmatprep.subr.mxu0 0.0
        %600 = vmatpush1.msra.mxu0 0.0
        %601 = vmatprep.subr.mxu0 0.0
        %602 = vmatpush1.msra.mxu0 0.0
        %603 = vmatprep.subr.mxu0 0.0
        %604 = vmatpush1.msra.mxu0 0.0
        %605 = vmatprep.subr.mxu0 0.0
        %606 = vmatpush1.msra.mxu0 0.0
        %607 = vmatprep.subr.mxu0 0.0
        %608 = vmatpush1.msra.mxu0 0.0
        %609 = vmatprep.subr.mxu0 0.0
        %610 = vmatpush1.msra.mxu0 0.0
        %611 = vmatprep.subr.mxu0 0.0
        %612 = vmatpush1.msra.mxu0 0.0
        %613 = vmatprep.subr.mxu0 %v442
        %614 = vmatpush1.msra.mxu0 %v439
        %615 = vmatprep.subr.mxu0 %v384
        %616 = vmatpush1.msra.mxu0 %v383
        %617 = vmatprep.subr.mxu0 %v377
        %618 = vmatpush1.msra.mxu0 %v376
        %619 = vmatprep.subr.mxu0 %v370
        %620 = vmatpush1.msra.mxu0 %v369
        %621 = vmatprep.subr.mxu0 0.0
        %622 = vmatpush2.msra.mxu0 0.0
        %623 = vmatprep.subr.mxu0 0.0
        %624 = vmatpush2.msra.mxu0 0.0
        %625 = vmatprep.subr.mxu0 0.0
        %626 = vmatpush2.msra.mxu0 0.0
        %627 = vmatprep.subr.mxu0 0.0
        %628 = vmatpush2.msra.mxu0 0.0
        %629 = vmatprep.subr.mxu0 0.0
        %630 = vmatpush2.msra.mxu0 0.0
        %631 = vmatprep.subr.mxu0 0.0
        %632 = vmatpush2.msra.mxu0 0.0
        %633 = vmatprep.subr.mxu0 0.0
        %634 = vmatpush2.msra.mxu0 0.0
        %635 = vmatprep.subr.mxu0 0.0
        %636 = vmatpush2.msra.mxu0 0.0
        %637 = vmatprep.subr.mxu0 0.0
        %638 = vmatpush2.msra.mxu0 0.0
        %639 = vmatprep.subr.mxu0 0.0
        %640 = vmatpush2.msra.mxu0 0.0
        %641 = vmatprep.subr.mxu0 0.0
        %642 = vmatpush2.msra.mxu0 0.0
        %643 = vmatprep.subr.mxu0 0.0
        %644 = vmatpush2.msra.mxu0 0.0
        %645 = vmatprep.subr.mxu0 0.0
        %646 = vmatpush2.msra.mxu0 0.0
        %647 = vmatprep.subr.mxu0 0.0
        %648 = vmatpush2.msra.mxu0 0.0
        %649 = vmatprep.subr.mxu0 0.0
        %650 = vmatpush2.msra.mxu0 0.0
        %651 = vmatprep.subr.mxu0 0.0
        %652 = vmatpush2.msra.mxu0 0.0
        %653 = vmatprep.mubr.f32.mxu0 0.0
        %654 = vmatmul.mubr.f32.gmra.mxu0 %v423
        %v655 = vpop.f32.mrf.mxu0
        %v656 = vadd.f32 %v412, %v655
        %v657 = vpop.f32.mrf.mxu0
        %v658 = vadd.f32 %v416, %v657
        %659 = vdwg.mxu0
        %660 = vmatprep.subr.mxu0 0.0
        %661 = vmatpush1.msra.mxu0 0.0
        %662 = vmatprep.subr.mxu0 0.0
        %663 = vmatpush1.msra.mxu0 0.0
        %664 = vmatprep.subr.mxu0 0.0
        %665 = vmatpush1.msra.mxu0 0.0
        %666 = vmatprep.subr.mxu0 0.0
        %667 = vmatpush1.msra.mxu0 0.0
        %668 = vmatprep.subr.mxu0 0.0
        %669 = vmatpush1.msra.mxu0 0.0
        %670 = vmatprep.subr.mxu0 0.0
        %671 = vmatpush1.msra.mxu0 0.0
        %672 = vmatprep.subr.mxu0 0.0
        %673 = vmatpush1.msra.mxu0 0.0
        %674 = vmatprep.subr.mxu0 0.0
        %675 = vmatpush1.msra.mxu0 0.0
        %676 = vmatprep.subr.mxu0 0.0
        %677 = vmatpush1.msra.mxu0 0.0
        %678 = vmatprep.subr.mxu0 0.0
        %679 = vmatpush1.msra.mxu0 0.0
        %680 = vmatprep.subr.mxu0 0.0
        %681 = vmatpush1.msra.mxu0 0.0
        %682 = vmatprep.subr.mxu0 0.0
        %683 = vmatpush1.msra.mxu0 0.0
        %684 = vmatprep.subr.mxu0 0.0
        %685 = vmatpush1.msra.mxu0 %v445
        %686 = vmatprep.subr.mxu0 0.0
        %687 = vmatpush1.msra.mxu0 %v385
        %688 = vmatprep.subr.mxu0 0.0
        %689 = vmatpush1.msra.mxu0 %v378
        %690 = vmatprep.subr.mxu0 0.0
        %691 = vmatpush1.msra.mxu0 %v371
        %692 = vmatprep.subr.mxu0 0.0
        %693 = vmatpush2.msra.mxu0 0.0
        %694 = vmatprep.subr.mxu0 0.0
        %695 = vmatpush2.msra.mxu0 0.0
        %696 = vmatprep.subr.mxu0 0.0
        %697 = vmatpush2.msra.mxu0 0.0
        %698 = vmatprep.subr.mxu0 0.0
        %699 = vmatpush2.msra.mxu0 0.0
        %700 = vmatprep.subr.mxu0 0.0
        %701 = vmatpush2.msra.mxu0 0.0
        %702 = vmatprep.subr.mxu0 0.0
        %703 = vmatpush2.msra.mxu0 0.0
        %704 = vmatprep.subr.mxu0 0.0
        %705 = vmatpush2.msra.mxu0 0.0
        %706 = vmatprep.subr.mxu0 0.0
        %707 = vmatpush2.msra.mxu0 0.0
        %708 = vmatprep.subr.mxu0 0.0
        %709 = vmatpush2.msra.mxu0 0.0
        %710 = vmatprep.subr.mxu0 0.0
        %711 = vmatpush2.msra.mxu0 0.0
        %712 = vmatprep.subr.mxu0 0.0
        %713 = vmatpush2.msra.mxu0 0.0
        %714 = vmatprep.subr.mxu0 0.0
        %715 = vmatpush2.msra.mxu0 0.0
        %716 = vmatprep.subr.mxu0 0.0
        %717 = vmatpush2.msra.mxu0 0.0
        %718 = vmatprep.subr.mxu0 0.0
        %719 = vmatpush2.msra.mxu0 0.0
        %720 = vmatprep.subr.mxu0 0.0
        %721 = vmatpush2.msra.mxu0 0.0
        %722 = vmatprep.subr.mxu0 0.0
        %723 = vmatpush2.msra.mxu0 0.0
        %724 = vmatprep.mubr.f32.mxu0 0.0
        %725 = vmatmul.mubr.f32.gmra.mxu0 %v423
        %v726 = vpop.f32.mrf.mxu0
        %v727 = vadd.f32 %v420, %v726
        %v728 = vpop.f32.mrf.mxu0
        %729 = vdwg.mxu0
        %v730 = vmax.f32 %v514, 0.0
        %v731 = vmax.f32 %v516, 0.0
        %v732 = vmax.f32 %v585, 0.0
        %v733 = vmax.f32 %v587, 0.0
        %v734 = vmax.f32 %v656, 0.0
        %v735 = vmax.f32 %v658, 0.0
        %v736 = vmax.f32 %v727, 0.0
        %v737 = vpack.c.bf16 %v730, %v730
        %v738 = vpack.c.bf16 %v731, %v731
        %v739 = vpack.c.bf16 %v732, %v732
        %v740 = vpack.c.bf16 %v733, %v733
        %v741 = vpack.c.bf16 %v734, %v734
        %v742 = vpack.c.bf16 %v735, %v735
        %v743 = vpack.c.bf16 %v736, %v736
        %v744 = vld [vmem:[%s295] sm:$0xff]
        %v745 = vld [vmem:[%s295 + $0x8] sm:$0xff]
        %v746 = vld [vmem:[%s295 + $0x10] sm:$0xf]
        %v747 = vld [vmem:[%s295 + $0x14] sm:$0xff]
        %v748 = vld [vmem:[%s295 + $0x1c] sm:$0xff]
        %v749 = vld [vmem:[%s295 + $0x24] sm:$0xf]
        %v750 = vld [vmem:[%s295 + $0x28] sm:$0xff]
        %v751 = vld [vmem:[%s295 + $0x30] sm:$0xff]
        %v752 = vld [vmem:[%s295 + $0x38] sm:$0xf]
        %v753 = vld [vmem:[%s295 + $0x3c] sm:$0xff]
        %v754 = vld [vmem:[%s295 + $0x44] sm:$0xff]
        %v755 = vld [vmem:[%s295 + $0x4c] sm:$0xf]
        %v756 = vld [vmem:[%s295 + $0x50] sm:$0xff]
        %v757 = vld [vmem:[%s295 + $0x58] sm:$0xff]
        %v758 = vld [vmem:[%s295 + $0x60] sm:$0xf]
        %v759 = vld [vmem:[%s295 + $0x64] sm:$0xff]
        %v760 = vld [vmem:[%s295 + $0x6c] sm:$0xff]
        %v761 = vld [vmem:[%s295 + $0x74] sm:$0xf]
        %v762 = vld [vmem:[%s295 + $0x78] sm:$0xff]
        %v763 = vld [vmem:[%s295 + $0x80] sm:$0xff]
        %v764 = vld [vmem:[%s295 + $0x88] sm:$0xf]
        %v765 = vld [vmem:[%s295 + $0x8c] sm:$0xff]
        %v766 = vld [vmem:[%s295 + $0x94] sm:$0xff]
        %v767 = vld [vmem:[%s295 + $0x9c] sm:$0xf]
        %v768 = vld [vmem:[%s295 + $0xa0] sm:$0xff]
        %v769 = vld [vmem:[%s295 + $0xa8] sm:$0xff]
        %v770 = vld [vmem:[%s295 + $0xb0] sm:$0xf]
        %v771 = vld [vmem:[%s295 + $0xb4] sm:$0xff]
        %v772 = vld [vmem:[%s295 + $0xbc] sm:$0xff]
        %v773 = vld [vmem:[%s295 + $0xc4] sm:$0xf]
        %v774 = vld [vmem:[%s295 + $0xc8] sm:$0xff]
        %v775 = vld [vmem:[%s295 + $0xd0] sm:$0xff]
        %v776 = vld [vmem:[%s295 + $0xd8] sm:$0xf]
        %v777 = vld [vmem:[%s295 + $0xdc] sm:$0xff]
        %v778 = vld [vmem:[%s295 + $0xe4] sm:$0xff]
        %v779 = vld [vmem:[%s295 + $0xec] sm:$0xf]
        %v780 = vld [vmem:[%s295 + $0xf0] sm:$0xff]
        %v781 = vld [vmem:[%s295 + $0xf8] sm:$0xff]
        %v782 = vld [vmem:[%s295 + $0x100] sm:$0xf]
        %v783 = vld [vmem:[%s295 + $0x104] sm:$0xff]
        %v784 = vld [vmem:[%s295 + $0x10c] sm:$0xff]
        %v785 = vld [vmem:[%s295 + $0x114] sm:$0xf]
        %v786 = vld [vmem:[%s295 + $0x118] sm:$0xff]
        %v787 = vld [vmem:[%s295 + $0x120] sm:$0xff]
        %v788 = vld [vmem:[%s295 + $0x128] sm:$0xf]
        %v789 = vld [vmem:[%s295 + $0x12c] sm:$0xff]
        %v790 = vld [vmem:[%s295 + $0x134] sm:$0xff]
        %v791 = vld [vmem:[%s295 + $0x13c] sm:$0xf]
        %v792 = vld [vmem:[%s295 + $0x140] sm:$0xff]
        %v793 = vld [vmem:[%s295 + $0x148] sm:$0xff]
        %v794 = vld [vmem:[%s295 + $0x150] sm:$0xf]
        %v795 = vld [vmem:[%s295 + $0x154] sm:$0xff]
        %v796 = vld [vmem:[%s295 + $0x15c] sm:$0xff]
        %v797 = vld [vmem:[%s295 + $0x164] sm:$0xf]
        %v798 = vld [vmem:[%s295 + $0x168] sm:$0xff]
        %v799 = vld [vmem:[%s295 + $0x170] sm:$0xff]
        %v800 = vld [vmem:[%s295 + $0x178] sm:$0xf]
        %v801 = vld [vmem:[%s295 + $0x17c] sm:$0xff]
        %v802 = vld [vmem:[%s295 + $0x184] sm:$0xff]
        %v803 = vld [vmem:[%s295 + $0x18c] sm:$0xf]
        %v804 = vld [vmem:[%s295 + $0x190] sm:$0xff]
        %v805 = vld [vmem:[%s295 + $0x198] sm:$0xff]
        %v806 = vld [vmem:[%s295 + $0x1a0] sm:$0xf]
        %v807 = vld [vmem:[%s295 + $0x1a4] sm:$0xff]
        %v808 = vld [vmem:[%s295 + $0x1ac] sm:$0xff]
        %v809 = vld [vmem:[%s295 + $0x1b4] sm:$0xf]
        %v810 = vld [vmem:[%s295 + $0x1b8] sm:$0xff]
        %v811 = vld [vmem:[%s295 + $0x1c0] sm:$0xff]
        %v812 = vld [vmem:[%s295 + $0x1c8] sm:$0xf]
        %v813 = vld [vmem:[%s295 + $0x1cc] sm:$0xff]
        %v814 = vld [vmem:[%s295 + $0x1d4] sm:$0xff]
        %v815 = vld [vmem:[%s295 + $0x1dc] sm:$0xf]
        %v816 = vld [vmem:[%s295 + $0x1e0] sm:$0xff]
        %v817 = vld [vmem:[%s295 + $0x1e8] sm:$0xff]
        %v818 = vld [vmem:[%s295 + $0x1f0] sm:$0xf]
        %v819 = vld [vmem:[%s295 + $0x1f4] sm:$0xff]
        %v820 = vld [vmem:[%s295 + $0x1fc] sm:$0xff]
        %v821 = vld [vmem:[%s295 + $0x204] sm:$0xf]
        %v822 = vld [vmem:[%s295 + $0x208] sm:$0xff]
        %v823 = vld [vmem:[%s295 + $0x210] sm:$0xff]
        %v824 = vld [vmem:[%s295 + $0x218] sm:$0xf]
        %v825 = vld [vmem:[%s295 + $0x21c] sm:$0xff]
        %v826 = vld [vmem:[%s295 + $0x224] sm:$0xff]
        %v827 = vld [vmem:[%s295 + $0x22c] sm:$0xf]
        %v828 = vld [vmem:[%s295 + $0x230] sm:$0xff]
        %v829 = vld [vmem:[%s295 + $0x238] sm:$0xff]
        %v830 = vld [vmem:[%s295 + $0x240] sm:$0xf]
        %v831 = vld [vmem:[%s295 + $0x244] sm:$0xff]
        %v832 = vld [vmem:[%s295 + $0x24c] sm:$0xff]
        %v833 = vld [vmem:[%s295 + $0x254] sm:$0xf]
        %v834 = vld [vmem:[%s295 + $0x258] sm:$0xff]
        %v835 = vld [vmem:[%s295 + $0x260] sm:$0xff]
        %v836 = vld [vmem:[%s295 + $0x268] sm:$0xf]
        %v837 = vld [vmem:[%s295 + $0x26c] sm:$0xff]
        %v838 = vld [vmem:[%s295 + $0x274] sm:$0xff]
        %v839 = vld [vmem:[%s295 + $0x27c] sm:$0xf]
        %v840 = vld [vmem:[%s295 + $0x280] sm:$0xff]
        %v841 = vld [vmem:[%s295 + $0x288] sm:$0xff]
        %v842 = vld [vmem:[%s295 + $0x290] sm:$0xf]
        %v843 = vld [vmem:[%s295 + $0x294] sm:$0xff]
        %v844 = vld [vmem:[%s295 + $0x29c] sm:$0xff]
        %v845 = vld [vmem:[%s295 + $0x2a4] sm:$0xf]
        %v846 = vld [vmem:[%s295 + $0x2a8] sm:$0xff]
        %v847 = vld [vmem:[%s295 + $0x2b0] sm:$0xff]
        %v848 = vld [vmem:[%s295 + $0x2b8] sm:$0xf]
        %v849 = vld [vmem:[%s295 + $0x2bc] sm:$0xff]
        %v850 = vld [vmem:[%s295 + $0x2c4] sm:$0xff]
        %v851 = vld [vmem:[%s295 + $0x2cc] sm:$0xf]
        %v852 = vld [vmem:[%s295 + $0x2d0] sm:$0xff]
        %v853 = vld [vmem:[%s295 + $0x2d8] sm:$0xff]
        %v854 = vld [vmem:[%s295 + $0x2e0] sm:$0xf]
        %v855 = vld [vmem:[%s295 + $0x2e4] sm:$0xff]
        %v856 = vld [vmem:[%s295 + $0x2ec] sm:$0xff]
        %v857 = vld [vmem:[%s295 + $0x2f4] sm:$0xf]
        %v858 = vld [vmem:[%s295 + $0x2f8] sm:$0xff]
        %v859 = vld [vmem:[%s295 + $0x300] sm:$0xff]
        %v860 = vld [vmem:[%s295 + $0x308] sm:$0xf]
        %v861 = vld [vmem:[%s295 + $0x30c] sm:$0xff]
        %v862 = vld [vmem:[%s295 + $0x314] sm:$0xff]
        %v863 = vld [vmem:[%s295 + $0x31c] sm:$0xf]
        %v864 = vld [vmem:[%s295 + $0x320] sm:$0xff]
        %v865 = vld [vmem:[%s295 + $0x328] sm:$0xff]
        %v866 = vld [vmem:[%s295 + $0x330] sm:$0xf]
        %v867 = vld [vmem:[%s295 + $0x334] sm:$0xff]
        %v868 = vld [vmem:[%s295 + $0x33c] sm:$0xff]
        %v869 = vld [vmem:[%s295 + $0x344] sm:$0xf]
        %v870 = vld [vmem:[%s295 + $0x348] sm:$0xff]
        %v871 = vld [vmem:[%s295 + $0x350] sm:$0xff]
        %v872 = vld [vmem:[%s295 + $0x358] sm:$0xf]
        %v873 = vld [vmem:[%s295 + $0x35c] sm:$0xff]
        %v874 = vld [vmem:[%s295 + $0x364] sm:$0xff]
        %v875 = vld [vmem:[%s295 + $0x36c] sm:$0xf]
        %v876 = vld [vmem:[%s295 + $0x370] sm:$0xff]
        %v877 = vld [vmem:[%s295 + $0x378] sm:$0xff]
        %v878 = vld [vmem:[%s295 + $0x380] sm:$0xf]
        %v879 = vld [vmem:[%s295 + $0x384] sm:$0xff]
        %v880 = vld [vmem:[%s295 + $0x38c] sm:$0xff]
        %v881 = vld [vmem:[%s295 + $0x394] sm:$0xf]
        %v882 = vld [vmem:[%s295 + $0x398] sm:$0xff]
        %v883 = vld [vmem:[%s295 + $0x3a0] sm:$0xff]
        %v884 = vld [vmem:[%s295 + $0x3a8] sm:$0xf]
        %v885 = vld [vmem:[%s295 + $0x3ac] sm:$0xff]
        %v886 = vld [vmem:[%s295 + $0x3b4] sm:$0xff]
        %v887 = vld [vmem:[%s295 + $0x3bc] sm:$0xf]
        %v888 = vld [vmem:[%s295 + $0x3c0] sm:$0xff]
        %v889 = vld [vmem:[%s295 + $0x3c8] sm:$0xff]
        %v890 = vld [vmem:[%s295 + $0x3d0] sm:$0xf]
        %v891 = vld [vmem:[%s295 + $0x3d4] sm:$0xff]
        %v892 = vld [vmem:[%s295 + $0x3dc] sm:$0xff]
        %v893 = vld [vmem:[%s295 + $0x3e4] sm:$0xf]
        %v894 = vld [vmem:[%s295 + $0x3e8] sm:$0xff]
        %v895 = vld [vmem:[%s295 + $0x3f0] sm:$0xff]
        %v896 = vld [vmem:[%s295 + $0x3f8] sm:$0xf]
        %v897 = vld [vmem:[%s295 + $0x3fc] sm:$0xff]
        %v898 = vld [vmem:[%s295 + $0x404] sm:$0xff]
        %v899 = vld [vmem:[%s295 + $0x40c] sm:$0xf]
        %v900 = vld [vmem:[%s295 + $0x410] sm:$0xff]
        %v901 = vld [vmem:[%s295 + $0x418] sm:$0xff]
        %v902 = vld [vmem:[%s295 + $0x420] sm:$0xf]
        %v903 = vld [vmem:[%s295 + $0x424] sm:$0xff]
        %v904 = vld [vmem:[%s295 + $0x42c] sm:$0xff]
        %v905 = vld [vmem:[%s295 + $0x434] sm:$0xf]
        %v906 = vld [vmem:[%s295 + $0x438] sm:$0xff]
        %v907 = vld [vmem:[%s295 + $0x440] sm:$0xff]
        %v908 = vld [vmem:[%s295 + $0x448] sm:$0xf]
        %v909 = vld [vmem:[%s295 + $0x44c] sm:$0xff]
        %v910 = vld [vmem:[%s295 + $0x454] sm:$0xff]
        %v911 = vld [vmem:[%s295 + $0x45c] sm:$0xf]
        %v912 = vld [vmem:[%s295 + $0x460] sm:$0xff]
        %v913 = vld [vmem:[%s295 + $0x468] sm:$0xff]
        %v914 = vld [vmem:[%s295 + $0x470] sm:$0xf]
        %v915 = vld [vmem:[%s295 + $0x474] sm:$0xff]
        %v916 = vld [vmem:[%s295 + $0x47c] sm:$0xff]
        %v917 = vld [vmem:[%s295 + $0x484] sm:$0xf]
        %v918 = vld [vmem:[%s295 + $0x488] sm:$0xff]
        %v919 = vld [vmem:[%s295 + $0x490] sm:$0xff]
        %v920 = vld [vmem:[%s295 + $0x498] sm:$0xf]
        %v921 = vld [vmem:[%s295 + $0x49c] sm:$0xff]
        %v922 = vld [vmem:[%s295 + $0x4a4] sm:$0xff]
        %v923 = vld [vmem:[%s295 + $0x4ac] sm:$0xf]
        %v924 = vld [vmem:[%s295 + $0x4b0] sm:$0xff]
        %v925 = vld [vmem:[%s295 + $0x4b8] sm:$0xff]
        %v926 = vld [vmem:[%s295 + $0x4c0] sm:$0xf]
        %v927 = vld [vmem:[%s295 + $0x4c4] sm:$0xff]
        %v928 = vld [vmem:[%s295 + $0x4cc] sm:$0xff]
        %v929 = vld [vmem:[%s295 + $0x4d4] sm:$0xf]
        %v930 = vld [vmem:[%s295 + $0x4d8] sm:$0xff]
        %v931 = vld [vmem:[%s295 + $0x4e0] sm:$0xff]
        %v932 = vld [vmem:[%s295 + $0x4e8] sm:$0xf]
        %v933 = vld [vmem:[%s295 + $0x4ec] sm:$0xff]
        %v934 = vld [vmem:[%s295 + $0x4f4] sm:$0xff]
        %v935 = vld [vmem:[%s295 + $0x4fc] sm:$0xf]
        %v936 = vld [vmem:[%s295 + $0x500] sm:$0xff]
        %v937 = vld [vmem:[%s295 + $0x508] sm:$0xff]
        %v938 = vld [vmem:[%s295 + $0x510] sm:$0xf]
        %v939 = vld [vmem:[%s295 + $0x514] sm:$0xff]
        %v940 = vld [vmem:[%s295 + $0x51c] sm:$0xff]
        %v941 = vld [vmem:[%s295 + $0x524] sm:$0xf]
        %v942 = vld [vmem:[%s295 + $0x528] sm:$0xff]
        %v943 = vld [vmem:[%s295 + $0x530] sm:$0xff]
        %v944 = vld [vmem:[%s295 + $0x538] sm:$0xf]
        %v945 = vld [vmem:[%s295 + $0x53c] sm:$0xff]
        %v946 = vld [vmem:[%s295 + $0x544] sm:$0xff]
        %v947 = vld [vmem:[%s295 + $0x54c] sm:$0xf]
        %v948 = vld [vmem:[%s295 + $0x550] sm:$0xff]
        %v949 = vld [vmem:[%s295 + $0x558] sm:$0xff]
        %v950 = vld [vmem:[%s295 + $0x560] sm:$0xf]
        %v951 = vld [vmem:[%s295 + $0x564] sm:$0xff]
        %v952 = vld [vmem:[%s295 + $0x56c] sm:$0xff]
        %v953 = vld [vmem:[%s295 + $0x574] sm:$0xf]
        %v954 = vld [vmem:[%s295 + $0x578] sm:$0xff]
        %v955 = vld [vmem:[%s295 + $0x580] sm:$0xff]
        %v956 = vld [vmem:[%s295 + $0x588] sm:$0xf]
        %v957 = vld [vmem:[%s295 + $0x58c] sm:$0xff]
        %v958 = vld [vmem:[%s295 + $0x594] sm:$0xff]
        %v959 = vld [vmem:[%s295 + $0x59c] sm:$0xf]
        %v960 = vld [vmem:[%s295 + $0x5a0] sm:$0xff]
        %v961 = vld [vmem:[%s295 + $0x5a8] sm:$0xff]
        %v962 = vld [vmem:[%s295 + $0x5b0] sm:$0xf]
        %v963 = vld [vmem:[%s295 + $0x5b4] sm:$0xff]
        %v964 = vld [vmem:[%s295 + $0x5bc] sm:$0xff]
        %v965 = vld [vmem:[%s295 + $0x5c4] sm:$0xf]
        %v966 = vld [vmem:[%s295 + $0x5c8] sm:$0xff]
        %v967 = vld [vmem:[%s295 + $0x5d0] sm:$0xff]
        %v968 = vld [vmem:[%s295 + $0x5d8] sm:$0xf]
        %v969 = vld [vmem:[%s295 + $0x5dc] sm:$0xff]
        %v970 = vld [vmem:[%s295 + $0x5e4] sm:$0xff]
        %v971 = vld [vmem:[%s295 + $0x5ec] sm:$0xf]
        %v972 = vld [vmem:[%s295 + $0x5f0] sm:$0xff]
        %v973 = vld [vmem:[%s295 + $0x5f8] sm:$0xff]
        %v974 = vld [vmem:[%s295 + $0x600] sm:$0xf]
        %v975 = vld [vmem:[%s295 + $0x604] sm:$0xff]
        %v976 = vld [vmem:[%s295 + $0x60c] sm:$0xff]
        %v977 = vld [vmem:[%s295 + $0x614] sm:$0xf]
        %v978 = vld [vmem:[%s295 + $0x618] sm:$0xff]
        %v979 = vld [vmem:[%s295 + $0x620] sm:$0xff]
        %v980 = vld [vmem:[%s295 + $0x628] sm:$0xf]
        %v981 = vld [vmem:[%s295 + $0x62c] sm:$0xff]
        %v982 = vld [vmem:[%s295 + $0x634] sm:$0xff]
        %v983 = vld [vmem:[%s295 + $0x63c] sm:$0xf]
        %v984 = vld [vmem:[%s295 + $0x640] sm:$0xff]
        %v985 = vld [vmem:[%s295 + $0x648] sm:$0xff]
        %v986 = vld [vmem:[%s295 + $0x650] sm:$0xf]
        %v987 = vld [vmem:[%s295 + $0x654] sm:$0xff]
        %v988 = vld [vmem:[%s295 + $0x65c] sm:$0xff]
        %v989 = vld [vmem:[%s295 + $0x664] sm:$0xf]
        %v990 = vld [vmem:[%s295 + $0x668] sm:$0xff]
        %v991 = vld [vmem:[%s295 + $0x670] sm:$0xff]
        %v992 = vld [vmem:[%s295 + $0x678] sm:$0xf]
        %v993 = vld [vmem:[%s295 + $0x67c] sm:$0xff]
        %v994 = vld [vmem:[%s295 + $0x684] sm:$0xff]
        %v995 = vld [vmem:[%s295 + $0x68c] sm:$0xf]
        %v996 = vld [vmem:[%s295 + $0x690] sm:$0xff]
        %v997 = vld [vmem:[%s295 + $0x698] sm:$0xff]
        %v998 = vld [vmem:[%s295 + $0x6a0] sm:$0xf]
        %v999 = vld [vmem:[%s295 + $0x6a4] sm:$0xff]
        %v1000 = vld [vmem:[%s295 + $0x6ac] sm:$0xff]
        %v1001 = vld [vmem:[%s295 + $0x6b4] sm:$0xf]
        %v1002 = vld [vmem:[%s295 + $0x6b8] sm:$0xff]
        %v1003 = vld [vmem:[%s295 + $0x6c0] sm:$0xff]
        %v1004 = vld [vmem:[%s295 + $0x6c8] sm:$0xf]
        %v1005 = vld [vmem:[%s295 + $0x6cc] sm:$0xff]
        %v1006 = vld [vmem:[%s295 + $0x6d4] sm:$0xff]
        %v1007 = vld [vmem:[%s295 + $0x6dc] sm:$0xf]
        %v1008 = vld [vmem:[%s295 + $0x6e0] sm:$0xff]
        %v1009 = vld [vmem:[%s295 + $0x6e8] sm:$0xff]
        %v1010 = vld [vmem:[%s295 + $0x6f0] sm:$0xf]
        %v1011 = vld [vmem:[%s295 + $0x6f4] sm:$0xff]
        %v1012 = vld [vmem:[%s295 + $0x6fc] sm:$0xff]
        %v1013 = vld [vmem:[%s295 + $0x704] sm:$0xf]
        %v1014 = vld [vmem:[%s295 + $0x708] sm:$0xff]
        %v1015 = vld [vmem:[%s295 + $0x710] sm:$0xff]
        %v1016 = vld [vmem:[%s295 + $0x718] sm:$0xf]
        %v1017 = vld [vmem:[%s295 + $0x71c] sm:$0xff]
        %v1018 = vld [vmem:[%s295 + $0x724] sm:$0xff]
        %v1019 = vld [vmem:[%s295 + $0x72c] sm:$0xf]
        %v1020 = vld [vmem:[%s295 + $0x730] sm:$0xff]
        %v1021 = vld [vmem:[%s295 + $0x738] sm:$0xff]
        %v1022 = vld [vmem:[%s295 + $0x740] sm:$0xf]
        %v1023 = vld [vmem:[%s295 + $0x744] sm:$0xff]
        %v1024 = vld [vmem:[%s295 + $0x74c] sm:$0xff]
        %v1025 = vld [vmem:[%s295 + $0x754] sm:$0xf]
        %v1026 = vld [vmem:[%s295 + $0x758] sm:$0xff]
        %v1027 = vld [vmem:[%s295 + $0x760] sm:$0xff]
        %v1028 = vld [vmem:[%s295 + $0x768] sm:$0xf]
        %v1029 = vld [vmem:[%s295 + $0x76c] sm:$0xff]
        %v1030 = vld [vmem:[%s295 + $0x774] sm:$0xff]
        %v1031 = vld [vmem:[%s295 + $0x77c] sm:$0xf]
        %v1032 = vld [vmem:[%s295 + $0x780] sm:$0xff]
        %v1033 = vld [vmem:[%s295 + $0x788] sm:$0xff]
        %v1034 = vld [vmem:[%s295 + $0x790] sm:$0xf]
        %v1035 = vld [vmem:[%s295 + $0x794] sm:$0xff]
        %v1036 = vld [vmem:[%s295 + $0x79c] sm:$0xff]
        %v1037 = vld [vmem:[%s295 + $0x7a4] sm:$0xf]
        %v1038 = vld [vmem:[%s295 + $0x7a8] sm:$0xff]
        %v1039 = vld [vmem:[%s295 + $0x7b0] sm:$0xff]
        %v1040 = vld [vmem:[%s295 + $0x7b8] sm:$0xf]
        %v1041 = vld [vmem:[%s295 + $0x7bc] sm:$0xff]
        %v1042 = vld [vmem:[%s295 + $0x7c4] sm:$0xff]
        %v1043 = vld [vmem:[%s295 + $0x7cc] sm:$0xf]
        %v1044 = vlaneseq
        %v1045 = vshrl.u32 %v1044, 7
        %v1046 = vsub.s32 3, %v1045
        %v1047 = vrot.slane %v358, %v1046
        %v1048 = vlaneseq
        %v1049 = vshrl.u32 %v1048, 7
        %v1050 = vsub.s32 3, %v1049
        %v1051 = vrot.slane %v359, %v1050
        %v1052 = vlaneseq
        %v1053 = vshrl.u32 %v1052, 7
        %v1054 = vsub.s32 3, %v1053
        %v1055 = vrot.slane %v360, %v1054
        %v1056 = vlaneseq
        %v1057 = vshrl.u32 %v1056, 7
        %v1058 = vsub.s32 3, %v1057
        %v1059 = vrot.slane %v361, %v1058
        %v1060 = vlaneseq
        %v1061 = vshrl.u32 %v1060, 7
        %v1062 = vsub.s32 3, %v1061
        %v1063 = vrot.slane %v362, %v1062
        %v1364 = vunpack.c.l.b16 %v744
        %v1365 = vunpack.c.h.b16 %v744
        %v1366 = vunpack.c.l.b16 %v745
        %v1367 = vunpack.c.h.b16 %v745
        %v1368 = vunpack.c.l.b16 %v746
        %v1369 = vunpack.c.l.b16 %v747
        %v1370 = vunpack.c.h.b16 %v747
        %v1371 = vunpack.c.l.b16 %v748
        %v1372 = vunpack.c.h.b16 %v748
        %v1373 = vunpack.c.l.b16 %v749
        %v1374 = vunpack.c.l.b16 %v750
        %v1375 = vunpack.c.h.b16 %v750
        %v1376 = vunpack.c.l.b16 %v751
        %v1377 = vunpack.c.h.b16 %v751
        %v1378 = vunpack.c.l.b16 %v752
        %v1379 = vunpack.c.l.b16 %v753
        %v1380 = vunpack.c.h.b16 %v753
        %v1381 = vunpack.c.l.b16 %v754
        %v1382 = vunpack.c.h.b16 %v754
        %v1383 = vunpack.c.l.b16 %v755
        %v1384 = vunpack.c.l.b16 %v756
        %v1385 = vunpack.c.h.b16 %v756
        %v1386 = vunpack.c.l.b16 %v757
        %v1387 = vunpack.c.h.b16 %v757
        %v1388 = vunpack.c.l.b16 %v758
        %v1389 = vunpack.c.l.b16 %v759
        %v1390 = vunpack.c.h.b16 %v759
        %v1391 = vunpack.c.l.b16 %v760
        %v1392 = vunpack.c.h.b16 %v760
        %v1393 = vunpack.c.l.b16 %v761
        %v1394 = vunpack.c.l.b16 %v762
        %v1395 = vunpack.c.h.b16 %v762
        %v1396 = vunpack.c.l.b16 %v763
        %v1397 = vunpack.c.h.b16 %v763
        %v1398 = vunpack.c.l.b16 %v764
        %v1399 = vunpack.c.l.b16 %v765
        %v1400 = vunpack.c.h.b16 %v765
        %v1401 = vunpack.c.l.b16 %v766
        %v1402 = vunpack.c.h.b16 %v766
        %v1403 = vunpack.c.l.b16 %v767
        %v1404 = vunpack.c.l.b16 %v768
        %v1405 = vunpack.c.h.b16 %v768
        %v1406 = vunpack.c.l.b16 %v769
        %v1407 = vunpack.c.h.b16 %v769
        %v1408 = vunpack.c.l.b16 %v770
        %v1409 = vunpack.c.l.b16 %v771
        %v1410 = vunpack.c.h.b16 %v771
        %v1411 = vunpack.c.l.b16 %v772
        %v1412 = vunpack.c.h.b16 %v772
        %v1413 = vunpack.c.l.b16 %v773
        %v1414 = vunpack.c.l.b16 %v774
        %v1415 = vunpack.c.h.b16 %v774
        %v1416 = vunpack.c.l.b16 %v775
        %v1417 = vunpack.c.h.b16 %v775
        %v1418 = vunpack.c.l.b16 %v776
        %v1419 = vunpack.c.l.b16 %v777
        %v1420 = vunpack.c.h.b16 %v777
        %v1421 = vunpack.c.l.b16 %v778
        %v1422 = vunpack.c.h.b16 %v778
        %v1423 = vunpack.c.l.b16 %v779
        %v1424 = vunpack.c.l.b16 %v780
        %v1425 = vunpack.c.h.b16 %v780
        %v1426 = vunpack.c.l.b16 %v781
        %v1427 = vunpack.c.h.b16 %v781
        %v1428 = vunpack.c.l.b16 %v782
        %v1429 = vunpack.c.l.b16 %v783
        %v1430 = vunpack.c.h.b16 %v783
        %v1431 = vunpack.c.l.b16 %v784
        %v1432 = vunpack.c.h.b16 %v784
        %v1433 = vunpack.c.l.b16 %v785
        %v1434 = vunpack.c.l.b16 %v786
        %v1435 = vunpack.c.h.b16 %v786
        %v1436 = vunpack.c.l.b16 %v787
        %v1437 = vunpack.c.h.b16 %v787
        %v1438 = vunpack.c.l.b16 %v788
        %v1439 = vunpack.c.l.b16 %v789
        %v1440 = vunpack.c.h.b16 %v789
        %v1441 = vunpack.c.l.b16 %v790
        %v1442 = vunpack.c.h.b16 %v790
        %v1443 = vunpack.c.l.b16 %v791
        %v1444 = vunpack.c.l.b16 %v792
        %v1445 = vunpack.c.h.b16 %v792
        %v1446 = vunpack.c.l.b16 %v793
        %v1447 = vunpack.c.h.b16 %v793
        %v1448 = vunpack.c.l.b16 %v794
        %v1449 = vunpack.c.l.b16 %v795
        %v1450 = vunpack.c.h.b16 %v795
        %v1451 = vunpack.c.l.b16 %v796
        %v1452 = vunpack.c.h.b16 %v796
        %v1453 = vunpack.c.l.b16 %v797
        %v1454 = vunpack.c.l.b16 %v798
        %v1455 = vunpack.c.h.b16 %v798
        %v1456 = vunpack.c.l.b16 %v799
        %v1457 = vunpack.c.h.b16 %v799
        %v1458 = vunpack.c.l.b16 %v800
        %v1459 = vunpack.c.l.b16 %v801
        %v1460 = vunpack.c.h.b16 %v801
        %v1461 = vunpack.c.l.b16 %v802
        %v1462 = vunpack.c.h.b16 %v802
        %v1463 = vunpack.c.l.b16 %v803
        %v1464 = vunpack.c.l.b16 %v804
        %v1465 = vunpack.c.h.b16 %v804
        %v1466 = vunpack.c.l.b16 %v805
        %v1467 = vunpack.c.h.b16 %v805
        %v1468 = vunpack.c.l.b16 %v806
        %v1469 = vunpack.c.l.b16 %v807
        %v1470 = vunpack.c.h.b16 %v807
        %v1471 = vunpack.c.l.b16 %v808
        %v1472 = vunpack.c.h.b16 %v808
        %v1473 = vunpack.c.l.b16 %v809
        %v1474 = vunpack.c.l.b16 %v810
        %v1475 = vunpack.c.h.b16 %v810
        %v1476 = vunpack.c.l.b16 %v811
        %v1477 = vunpack.c.h.b16 %v811
        %v1478 = vunpack.c.l.b16 %v812
        %v1479 = vunpack.c.l.b16 %v813
        %v1480 = vunpack.c.h.b16 %v813
        %v1481 = vunpack.c.l.b16 %v814
        %v1482 = vunpack.c.h.b16 %v814
        %v1483 = vunpack.c.l.b16 %v815
        %v1484 = vunpack.c.l.b16 %v816
        %v1485 = vunpack.c.h.b16 %v816
        %v1486 = vunpack.c.l.b16 %v817
        %v1487 = vunpack.c.h.b16 %v817
        %v1488 = vunpack.c.l.b16 %v818
        %v1489 = vunpack.c.l.b16 %v819
        %v1490 = vunpack.c.h.b16 %v819
        %v1491 = vunpack.c.l.b16 %v820
        %v1492 = vunpack.c.h.b16 %v820
        %v1493 = vunpack.c.l.b16 %v821
        %v1494 = vunpack.c.l.b16 %v822
        %v1495 = vunpack.c.h.b16 %v822
        %v1496 = vunpack.c.l.b16 %v823
        %v1497 = vunpack.c.h.b16 %v823
        %v1498 = vunpack.c.l.b16 %v824
        %v1499 = vunpack.c.l.b16 %v825
        %v1500 = vunpack.c.h.b16 %v825
        %v1501 = vunpack.c.l.b16 %v826
        %v1502 = vunpack.c.h.b16 %v826
        %v1503 = vunpack.c.l.b16 %v827
        %v1504 = vunpack.c.l.b16 %v828
        %v1505 = vunpack.c.h.b16 %v828
        %v1506 = vunpack.c.l.b16 %v829
        %v1507 = vunpack.c.h.b16 %v829
        %v1508 = vunpack.c.l.b16 %v830
        %v1509 = vunpack.c.l.b16 %v831
        %v1510 = vunpack.c.h.b16 %v831
        %v1511 = vunpack.c.l.b16 %v832
        %v1512 = vunpack.c.h.b16 %v832
        %v1513 = vunpack.c.l.b16 %v833
        %v1514 = vunpack.c.l.b16 %v834
        %v1515 = vunpack.c.h.b16 %v834
        %v1516 = vunpack.c.l.b16 %v835
        %v1517 = vunpack.c.h.b16 %v835
        %v1518 = vunpack.c.l.b16 %v836
        %v1519 = vunpack.c.l.b16 %v837
        %v1520 = vunpack.c.h.b16 %v837
        %v1521 = vunpack.c.l.b16 %v838
        %v1522 = vunpack.c.h.b16 %v838
        %v1523 = vunpack.c.l.b16 %v839
        %v1524 = vunpack.c.l.b16 %v840
        %v1525 = vunpack.c.h.b16 %v840
        %v1526 = vunpack.c.l.b16 %v841
        %v1527 = vunpack.c.h.b16 %v841
        %v1528 = vunpack.c.l.b16 %v842
        %v1529 = vunpack.c.l.b16 %v843
        %v1530 = vunpack.c.h.b16 %v843
        %v1531 = vunpack.c.l.b16 %v844
        %v1532 = vunpack.c.h.b16 %v844
        %v1533 = vunpack.c.l.b16 %v845
        %v1534 = vunpack.c.l.b16 %v846
        %v1535 = vunpack.c.h.b16 %v846
        %v1536 = vunpack.c.l.b16 %v847
        %v1537 = vunpack.c.h.b16 %v847
        %v1538 = vunpack.c.l.b16 %v848
        %v1539 = vunpack.c.l.b16 %v849
        %v1540 = vunpack.c.h.b16 %v849
        %v1541 = vunpack.c.l.b16 %v850
        %v1542 = vunpack.c.h.b16 %v850
        %v1543 = vunpack.c.l.b16 %v851
        %v1544 = vunpack.c.l.b16 %v852
        %v1545 = vunpack.c.h.b16 %v852
        %v1546 = vunpack.c.l.b16 %v853
        %v1547 = vunpack.c.h.b16 %v853
        %v1548 = vunpack.c.l.b16 %v854
        %v1549 = vunpack.c.l.b16 %v855
        %v1550 = vunpack.c.h.b16 %v855
        %v1551 = vunpack.c.l.b16 %v856
        %v1552 = vunpack.c.h.b16 %v856
        %v1553 = vunpack.c.l.b16 %v857
        %v1554 = vunpack.c.l.b16 %v858
        %v1555 = vunpack.c.h.b16 %v858
        %v1556 = vunpack.c.l.b16 %v859
        %v1557 = vunpack.c.h.b16 %v859
        %v1558 = vunpack.c.l.b16 %v860
        %v1559 = vunpack.c.l.b16 %v861
        %v1560 = vunpack.c.h.b16 %v861
        %v1561 = vunpack.c.l.b16 %v862
        %v1562 = vunpack.c.h.b16 %v862
        %v1563 = vunpack.c.l.b16 %v863
        %v1564 = vunpack.c.l.b16 %v864
        %v1565 = vunpack.c.h.b16 %v864
        %v1566 = vunpack.c.l.b16 %v865
        %v1567 = vunpack.c.h.b16 %v865
        %v1568 = vunpack.c.l.b16 %v866
        %v1569 = vunpack.c.l.b16 %v867
        %v1570 = vunpack.c.h.b16 %v867
        %v1571 = vunpack.c.l.b16 %v868
        %v1572 = vunpack.c.h.b16 %v868
        %v1573 = vunpack.c.l.b16 %v869
        %v1574 = vunpack.c.l.b16 %v870
        %v1575 = vunpack.c.h.b16 %v870
        %v1576 = vunpack.c.l.b16 %v871
        %v1577 = vunpack.c.h.b16 %v871
        %v1578 = vunpack.c.l.b16 %v872
        %v1579 = vunpack.c.l.b16 %v873
        %v1580 = vunpack.c.h.b16 %v873
        %v1581 = vunpack.c.l.b16 %v874
        %v1582 = vunpack.c.h.b16 %v874
        %v1583 = vunpack.c.l.b16 %v875
        %v1584 = vunpack.c.l.b16 %v876
        %v1585 = vunpack.c.h.b16 %v876
        %v1586 = vunpack.c.l.b16 %v877
        %v1587 = vunpack.c.h.b16 %v877
        %v1588 = vunpack.c.l.b16 %v878
        %v1589 = vunpack.c.l.b16 %v879
        %v1590 = vunpack.c.h.b16 %v879
        %v1591 = vunpack.c.l.b16 %v880
        %v1592 = vunpack.c.h.b16 %v880
        %v1593 = vunpack.c.l.b16 %v881
        %v1594 = vunpack.c.l.b16 %v882
        %v1595 = vunpack.c.h.b16 %v882
        %v1596 = vunpack.c.l.b16 %v883
        %v1597 = vunpack.c.h.b16 %v883
        %v1598 = vunpack.c.l.b16 %v884
        %v1599 = vunpack.c.l.b16 %v885
        %v1600 = vunpack.c.h.b16 %v885
        %v1601 = vunpack.c.l.b16 %v886
        %v1602 = vunpack.c.h.b16 %v886
        %v1603 = vunpack.c.l.b16 %v887
        %v1604 = vunpack.c.l.b16 %v888
        %v1605 = vunpack.c.h.b16 %v888
        %v1606 = vunpack.c.l.b16 %v889
        %v1607 = vunpack.c.h.b16 %v889
        %v1608 = vunpack.c.l.b16 %v890
        %v1609 = vunpack.c.l.b16 %v891
        %v1610 = vunpack.c.h.b16 %v891
        %v1611 = vunpack.c.l.b16 %v892
        %v1612 = vunpack.c.h.b16 %v892
        %v1613 = vunpack.c.l.b16 %v893
        %v1614 = vunpack.c.l.b16 %v894
        %v1615 = vunpack.c.h.b16 %v894
        %v1616 = vunpack.c.l.b16 %v895
        %v1617 = vunpack.c.h.b16 %v895
        %v1618 = vunpack.c.l.b16 %v896
        %v1619 = vunpack.c.l.b16 %v897
        %v1620 = vunpack.c.h.b16 %v897
        %v1621 = vunpack.c.l.b16 %v898
        %v1622 = vunpack.c.h.b16 %v898
        %v1623 = vunpack.c.l.b16 %v899
        %v1624 = vunpack.c.l.b16 %v900
        %v1625 = vunpack.c.h.b16 %v900
        %v1626 = vunpack.c.l.b16 %v901
        %v1627 = vunpack.c.h.b16 %v901
        %v1628 = vunpack.c.l.b16 %v902
        %v1629 = vunpack.c.l.b16 %v903
        %v1630 = vunpack.c.h.b16 %v903
        %v1631 = vunpack.c.l.b16 %v904
        %v1632 = vunpack.c.h.b16 %v904
        %v1633 = vunpack.c.l.b16 %v905
        %v1634 = vunpack.c.l.b16 %v906
        %v1635 = vunpack.c.h.b16 %v906
        %v1636 = vunpack.c.l.b16 %v907
        %v1637 = vunpack.c.h.b16 %v907
        %v1638 = vunpack.c.l.b16 %v908
        %v1639 = vunpack.c.l.b16 %v909
        %v1640 = vunpack.c.h.b16 %v909
        %v1641 = vunpack.c.l.b16 %v910
        %v1642 = vunpack.c.h.b16 %v910
        %v1643 = vunpack.c.l.b16 %v911
        %v1644 = vunpack.c.l.b16 %v912
        %v1645 = vunpack.c.h.b16 %v912
        %v1646 = vunpack.c.l.b16 %v913
        %v1647 = vunpack.c.h.b16 %v913
        %v1648 = vunpack.c.l.b16 %v914
        %v1649 = vunpack.c.l.b16 %v915
        %v1650 = vunpack.c.h.b16 %v915
        %v1651 = vunpack.c.l.b16 %v916
        %v1652 = vunpack.c.h.b16 %v916
        %v1653 = vunpack.c.l.b16 %v917
        %v1654 = vunpack.c.l.b16 %v918
        %v1655 = vunpack.c.h.b16 %v918
        %v1656 = vunpack.c.l.b16 %v919
        %v1657 = vunpack.c.h.b16 %v919
        %v1658 = vunpack.c.l.b16 %v920
        %v1659 = vunpack.c.l.b16 %v921
        %v1660 = vunpack.c.h.b16 %v921
        %v1661 = vunpack.c.l.b16 %v922
        %v1662 = vunpack.c.h.b16 %v922
        %v1663 = vunpack.c.l.b16 %v923
        %v1664 = vunpack.c.l.b16 %v924
        %v1665 = vunpack.c.h.b16 %v924
        %v1666 = vunpack.c.l.b16 %v925
        %v1667 = vunpack.c.h.b16 %v925
        %v1668 = vunpack.c.l.b16 %v926
        %v1669 = vunpack.c.l.b16 %v927
        %v1670 = vunpack.c.h.b16 %v927
        %v1671 = vunpack.c.l.b16 %v928
        %v1672 = vunpack.c.h.b16 %v928
        %v1673 = vunpack.c.l.b16 %v929
        %v1674 = vunpack.c.l.b16 %v930
        %v1675 = vunpack.c.h.b16 %v930
        %v1676 = vunpack.c.l.b16 %v931
        %v1677 = vunpack.c.h.b16 %v931
        %v1678 = vunpack.c.l.b16 %v932
        %v1679 = vunpack.c.l.b16 %v933
        %v1680 = vunpack.c.h.b16 %v933
        %v1681 = vunpack.c.l.b16 %v934
        %v1682 = vunpack.c.h.b16 %v934
        %v1683 = vunpack.c.l.b16 %v935
        %v1684 = vunpack.c.l.b16 %v936
        %v1685 = vunpack.c.h.b16 %v936
        %v1686 = vunpack.c.l.b16 %v937
        %v1687 = vunpack.c.h.b16 %v937
        %v1688 = vunpack.c.l.b16 %v938
        %v1689 = vunpack.c.l.b16 %v939
        %v1690 = vunpack.c.h.b16 %v939
        %v1691 = vunpack.c.l.b16 %v940
        %v1692 = vunpack.c.h.b16 %v940
        %v1693 = vunpack.c.l.b16 %v941
        %v1694 = vunpack.c.l.b16 %v942
        %v1695 = vunpack.c.h.b16 %v942
        %v1696 = vunpack.c.l.b16 %v943
        %v1697 = vunpack.c.h.b16 %v943
        %v1698 = vunpack.c.l.b16 %v944
        %v1699 = vunpack.c.l.b16 %v945
        %v1700 = vunpack.c.h.b16 %v945
        %v1701 = vunpack.c.l.b16 %v946
        %v1702 = vunpack.c.h.b16 %v946
        %v1703 = vunpack.c.l.b16 %v947
        %v1704 = vunpack.c.l.b16 %v948
        %v1705 = vunpack.c.h.b16 %v948
        %v1706 = vunpack.c.l.b16 %v949
        %v1707 = vunpack.c.h.b16 %v949
        %v1708 = vunpack.c.l.b16 %v950
        %v1709 = vunpack.c.l.b16 %v951
        %v1710 = vunpack.c.h.b16 %v951
        %v1711 = vunpack.c.l.b16 %v952
        %v1712 = vunpack.c.h.b16 %v952
        %v1713 = vunpack.c.l.b16 %v953
        %v1714 = vunpack.c.l.b16 %v954
        %v1715 = vunpack.c.h.b16 %v954
        %v1716 = vunpack.c.l.b16 %v955
        %v1717 = vunpack.c.h.b16 %v955
        %v1718 = vunpack.c.l.b16 %v956
        %v1719 = vunpack.c.l.b16 %v957
        %v1720 = vunpack.c.h.b16 %v957
        %v1721 = vunpack.c.l.b16 %v958
        %v1722 = vunpack.c.h.b16 %v958
        %v1723 = vunpack.c.l.b16 %v959
        %v1724 = vunpack.c.l.b16 %v960
        %v1725 = vunpack.c.h.b16 %v960
        %v1726 = vunpack.c.l.b16 %v961
        %v1727 = vunpack.c.h.b16 %v961
        %v1728 = vunpack.c.l.b16 %v962
        %v1729 = vunpack.c.l.b16 %v963
        %v1730 = vunpack.c.h.b16 %v963
        %v1731 = vunpack.c.l.b16 %v964
        %v1732 = vunpack.c.h.b16 %v964
        %v1733 = vunpack.c.l.b16 %v965
        %v1734 = vunpack.c.l.b16 %v966
        %v1735 = vunpack.c.h.b16 %v966
        %v1736 = vunpack.c.l.b16 %v967
        %v1737 = vunpack.c.h.b16 %v967
        %v1738 = vunpack.c.l.b16 %v968
        %v1739 = vunpack.c.l.b16 %v969
        %v1740 = vunpack.c.h.b16 %v969
        %v1741 = vunpack.c.l.b16 %v970
        %v1742 = vunpack.c.h.b16 %v970
        %v1743 = vunpack.c.l.b16 %v971
        %v1744 = vunpack.c.l.b16 %v972
        %v1745 = vunpack.c.h.b16 %v972
        %v1746 = vunpack.c.l.b16 %v973
        %v1747 = vunpack.c.h.b16 %v973
        %v1748 = vunpack.c.l.b16 %v974
        %v1749 = vunpack.c.l.b16 %v975
        %v1750 = vunpack.c.h.b16 %v975
        %v1751 = vunpack.c.l.b16 %v976
        %v1752 = vunpack.c.h.b16 %v976
        %v1753 = vunpack.c.l.b16 %v977
        %v1754 = vunpack.c.l.b16 %v978
        %v1755 = vunpack.c.h.b16 %v978
        %v1756 = vunpack.c.l.b16 %v979
        %v1757 = vunpack.c.h.b16 %v979
        %v1758 = vunpack.c.l.b16 %v980
        %v1759 = vunpack.c.l.b16 %v981
        %v1760 = vunpack.c.h.b16 %v981
        %v1761 = vunpack.c.l.b16 %v982
        %v1762 = vunpack.c.h.b16 %v982
        %v1763 = vunpack.c.l.b16 %v983
        %v1764 = vunpack.c.l.b16 %v984
        %v1765 = vunpack.c.h.b16 %v984
        %v1766 = vunpack.c.l.b16 %v985
        %v1767 = vunpack.c.h.b16 %v985
        %v1768 = vunpack.c.l.b16 %v986
        %v1769 = vunpack.c.l.b16 %v987
        %v1770 = vunpack.c.h.b16 %v987
        %v1771 = vunpack.c.l.b16 %v988
        %v1772 = vunpack.c.h.b16 %v988
        %v1773 = vunpack.c.l.b16 %v989
        %v1774 = vunpack.c.l.b16 %v990
        %v1775 = vunpack.c.h.b16 %v990
        %v1776 = vunpack.c.l.b16 %v991
        %v1777 = vunpack.c.h.b16 %v991
        %v1778 = vunpack.c.l.b16 %v992
        %v1779 = vunpack.c.l.b16 %v993
        %v1780 = vunpack.c.h.b16 %v993
        %v1781 = vunpack.c.l.b16 %v994
        %v1782 = vunpack.c.h.b16 %v994
        %v1783 = vunpack.c.l.b16 %v995
        %v1784 = vunpack.c.l.b16 %v996
        %v1785 = vunpack.c.h.b16 %v996
        %v1786 = vunpack.c.l.b16 %v997
        %v1787 = vunpack.c.h.b16 %v997
        %v1788 = vunpack.c.l.b16 %v998
        %v1789 = vunpack.c.l.b16 %v999
        %v1790 = vunpack.c.h.b16 %v999
        %v1791 = vunpack.c.l.b16 %v1000
        %v1792 = vunpack.c.h.b16 %v1000
        %v1793 = vunpack.c.l.b16 %v1001
        %v1794 = vunpack.c.l.b16 %v1002
        %v1795 = vunpack.c.h.b16 %v1002
        %v1796 = vunpack.c.l.b16 %v1003
        %v1797 = vunpack.c.h.b16 %v1003
        %v1798 = vunpack.c.l.b16 %v1004
        %v1799 = vunpack.c.l.b16 %v1005
        %v1800 = vunpack.c.h.b16 %v1005
        %v1801 = vunpack.c.l.b16 %v1006
        %v1802 = vunpack.c.h.b16 %v1006
        %v1803 = vunpack.c.l.b16 %v1007
        %v1804 = vunpack.c.l.b16 %v1008
        %v1805 = vunpack.c.h.b16 %v1008
        %v1806 = vunpack.c.l.b16 %v1009
        %v1807 = vunpack.c.h.b16 %v1009
        %v1808 = vunpack.c.l.b16 %v1010
        %v1809 = vunpack.c.l.b16 %v1011
        %v1810 = vunpack.c.h.b16 %v1011
        %v1811 = vunpack.c.l.b16 %v1012
        %v1812 = vunpack.c.h.b16 %v1012
        %v1813 = vunpack.c.l.b16 %v1013
        %v1814 = vunpack.c.l.b16 %v1014
        %v1815 = vunpack.c.h.b16 %v1014
        %v1816 = vunpack.c.l.b16 %v1015
        %v1817 = vunpack.c.h.b16 %v1015
        %v1818 = vunpack.c.l.b16 %v1016
        %v1819 = vunpack.c.l.b16 %v1017
        %v1820 = vunpack.c.h.b16 %v1017
        %v1821 = vunpack.c.l.b16 %v1018
        %v1822 = vunpack.c.h.b16 %v1018
        %v1823 = vunpack.c.l.b16 %v1019
        %v1824 = vunpack.c.l.b16 %v1020
        %v1825 = vunpack.c.h.b16 %v1020
        %v1826 = vunpack.c.l.b16 %v1021
        %v1827 = vunpack.c.h.b16 %v1021
        %v1828 = vunpack.c.l.b16 %v1022
        %v1829 = vunpack.c.l.b16 %v1023
        %v1830 = vunpack.c.h.b16 %v1023
        %v1831 = vunpack.c.l.b16 %v1024
        %v1832 = vunpack.c.h.b16 %v1024
        %v1833 = vunpack.c.l.b16 %v1025
        %v1834 = vunpack.c.l.b16 %v1026
        %v1835 = vunpack.c.h.b16 %v1026
        %v1836 = vunpack.c.l.b16 %v1027
        %v1837 = vunpack.c.h.b16 %v1027
        %v1838 = vunpack.c.l.b16 %v1028
        %v1839 = vunpack.c.l.b16 %v1029
        %v1840 = vunpack.c.h.b16 %v1029
        %v1841 = vunpack.c.l.b16 %v1030
        %v1842 = vunpack.c.h.b16 %v1030
        %v1843 = vunpack.c.l.b16 %v1031
        %v1844 = vunpack.c.l.b16 %v1032
        %v1845 = vunpack.c.h.b16 %v1032
        %v1846 = vunpack.c.l.b16 %v1033
        %v1847 = vunpack.c.h.b16 %v1033
        %v1848 = vunpack.c.l.b16 %v1034
        %v1849 = vunpack.c.l.b16 %v1035
        %v1850 = vunpack.c.h.b16 %v1035
        %v1851 = vunpack.c.l.b16 %v1036
        %v1852 = vunpack.c.h.b16 %v1036
        %v1853 = vunpack.c.l.b16 %v1037
        %v1854 = vunpack.c.l.b16 %v1038
        %v1855 = vunpack.c.h.b16 %v1038
        %v1856 = vunpack.c.l.b16 %v1039
        %v1857 = vunpack.c.h.b16 %v1039
        %v1858 = vunpack.c.l.b16 %v1040
        %v1859 = vunpack.c.l.b16 %v1041
        %v1860 = vunpack.c.h.b16 %v1041
        %v1861 = vunpack.c.l.b16 %v1042
        %v1862 = vunpack.c.h.b16 %v1042
        %v1863 = vunpack.c.l.b16 %v1043
        %v1864 = vpack.c.b16 %v1369, %v1364
        %v1865 = vpack.c.b16 %v1370, %v1365
        %v1866 = vpack.c.b16 %v1371, %v1366
        %v1867 = vpack.c.b16 %v1372, %v1367
        %v1868 = vpack.c.b16 %v1373, %v1368
        %v1869 = vpack.c.b16 %v1379, %v1374
        %v1870 = vpack.c.b16 %v1380, %v1375
        %v1871 = vpack.c.b16 %v1381, %v1376
        %v1872 = vpack.c.b16 %v1382, %v1377
        %v1873 = vpack.c.b16 %v1383, %v1378
        %v1874 = vpack.c.b16 %v1389, %v1384
        %v1875 = vpack.c.b16 %v1390, %v1385
        %v1876 = vpack.c.b16 %v1391, %v1386
        %v1877 = vpack.c.b16 %v1392, %v1387
        %v1878 = vpack.c.b16 %v1393, %v1388
        %v1879 = vpack.c.b16 %v1399, %v1394
        %v1880 = vpack.c.b16 %v1400, %v1395
        %v1881 = vpack.c.b16 %v1401, %v1396
        %v1882 = vpack.c.b16 %v1402, %v1397
        %v1883 = vpack.c.b16 %v1403, %v1398
        %v1884 = vpack.c.b16 %v1409, %v1404
        %v1885 = vpack.c.b16 %v1410, %v1405
        %v1886 = vpack.c.b16 %v1411, %v1406
        %v1887 = vpack.c.b16 %v1412, %v1407
        %v1888 = vpack.c.b16 %v1413, %v1408
        %v1889 = vpack.c.b16 %v1419, %v1414
        %v1890 = vpack.c.b16 %v1420, %v1415
        %v1891 = vpack.c.b16 %v1421, %v1416
        %v1892 = vpack.c.b16 %v1422, %v1417
        %v1893 = vpack.c.b16 %v1423, %v1418
        %v1894 = vpack.c.b16 %v1429, %v1424
        %v1895 = vpack.c.b16 %v1430, %v1425
        %v1896 = vpack.c.b16 %v1431, %v1426
        %v1897 = vpack.c.b16 %v1432, %v1427
        %v1898 = vpack.c.b16 %v1433, %v1428
        %v1899 = vpack.c.b16 %v1439, %v1434
        %v1900 = vpack.c.b16 %v1440, %v1435
        %v1901 = vpack.c.b16 %v1441, %v1436
        %v1902 = vpack.c.b16 %v1442, %v1437
        %v1903 = vpack.c.b16 %v1443, %v1438
        %v1904 = vpack.c.b16 %v1449, %v1444
        %v1905 = vpack.c.b16 %v1450, %v1445
        %v1906 = vpack.c.b16 %v1451, %v1446
        %v1907 = vpack.c.b16 %v1452, %v1447
        %v1908 = vpack.c.b16 %v1453, %v1448
        %v1909 = vpack.c.b16 %v1459, %v1454
        %v1910 = vpack.c.b16 %v1460, %v1455
        %v1911 = vpack.c.b16 %v1461, %v1456
        %v1912 = vpack.c.b16 %v1462, %v1457
        %v1913 = vpack.c.b16 %v1463, %v1458
        %v1914 = vpack.c.b16 %v1469, %v1464
        %v1915 = vpack.c.b16 %v1470, %v1465
        %v1916 = vpack.c.b16 %v1471, %v1466
        %v1917 = vpack.c.b16 %v1472, %v1467
        %v1918 = vpack.c.b16 %v1473, %v1468
        %v1919 = vpack.c.b16 %v1479, %v1474
        %v1920 = vpack.c.b16 %v1480, %v1475
        %v1921 = vpack.c.b16 %v1481, %v1476
        %v1922 = vpack.c.b16 %v1482, %v1477
        %v1923 = vpack.c.b16 %v1483, %v1478
        %v1924 = vpack.c.b16 %v1489, %v1484
        %v1925 = vpack.c.b16 %v1490, %v1485
        %v1926 = vpack.c.b16 %v1491, %v1486
        %v1927 = vpack.c.b16 %v1492, %v1487
        %v1928 = vpack.c.b16 %v1493, %v1488
        %v1929 = vpack.c.b16 %v1499, %v1494
        %v1930 = vpack.c.b16 %v1500, %v1495
        %v1931 = vpack.c.b16 %v1501, %v1496
        %v1932 = vpack.c.b16 %v1502, %v1497
        %v1933 = vpack.c.b16 %v1503, %v1498
        %v1934 = vpack.c.b16 %v1509, %v1504
        %v1935 = vpack.c.b16 %v1510, %v1505
        %v1936 = vpack.c.b16 %v1511, %v1506
        %v1937 = vpack.c.b16 %v1512, %v1507
        %v1938 = vpack.c.b16 %v1513, %v1508
        %v1939 = vpack.c.b16 %v1519, %v1514
        %v1940 = vpack.c.b16 %v1520, %v1515
        %v1941 = vpack.c.b16 %v1521, %v1516
        %v1942 = vpack.c.b16 %v1522, %v1517
        %v1943 = vpack.c.b16 %v1523, %v1518
        %v1944 = vpack.c.b16 %v1529, %v1524
        %v1945 = vpack.c.b16 %v1530, %v1525
        %v1946 = vpack.c.b16 %v1531, %v1526
        %v1947 = vpack.c.b16 %v1532, %v1527
        %v1948 = vpack.c.b16 %v1533, %v1528
        %v1949 = vpack.c.b16 %v1539, %v1534
        %v1950 = vpack.c.b16 %v1540, %v1535
        %v1951 = vpack.c.b16 %v1541, %v1536
        %v1952 = vpack.c.b16 %v1542, %v1537
        %v1953 = vpack.c.b16 %v1543, %v1538
        %v1954 = vpack.c.b16 %v1549, %v1544
        %v1955 = vpack.c.b16 %v1550, %v1545
        %v1956 = vpack.c.b16 %v1551, %v1546
        %v1957 = vpack.c.b16 %v1552, %v1547
        %v1958 = vpack.c.b16 %v1553, %v1548
        %v1959 = vpack.c.b16 %v1559, %v1554
        %v1960 = vpack.c.b16 %v1560, %v1555
        %v1961 = vpack.c.b16 %v1561, %v1556
        %v1962 = vpack.c.b16 %v1562, %v1557
        %v1963 = vpack.c.b16 %v1563, %v1558
        %v1964 = vpack.c.b16 %v1569, %v1564
        %v1965 = vpack.c.b16 %v1570, %v1565
        %v1966 = vpack.c.b16 %v1571, %v1566
        %v1967 = vpack.c.b16 %v1572, %v1567
        %v1968 = vpack.c.b16 %v1573, %v1568
        %v1969 = vpack.c.b16 %v1579, %v1574
        %v1970 = vpack.c.b16 %v1580, %v1575
        %v1971 = vpack.c.b16 %v1581, %v1576
        %v1972 = vpack.c.b16 %v1582, %v1577
        %v1973 = vpack.c.b16 %v1583, %v1578
        %v1974 = vpack.c.b16 %v1589, %v1584
        %v1975 = vpack.c.b16 %v1590, %v1585
        %v1976 = vpack.c.b16 %v1591, %v1586
        %v1977 = vpack.c.b16 %v1592, %v1587
        %v1978 = vpack.c.b16 %v1593, %v1588
        %v1979 = vpack.c.b16 %v1599, %v1594
        %v1980 = vpack.c.b16 %v1600, %v1595
        %v1981 = vpack.c.b16 %v1601, %v1596
        %v1982 = vpack.c.b16 %v1602, %v1597
        %v1983 = vpack.c.b16 %v1603, %v1598
        %v1984 = vpack.c.b16 %v1609, %v1604
        %v1985 = vpack.c.b16 %v1610, %v1605
        %v1986 = vpack.c.b16 %v1611, %v1606
        %v1987 = vpack.c.b16 %v1612, %v1607
        %v1988 = vpack.c.b16 %v1613, %v1608
        %v1989 = vpack.c.b16 %v1619, %v1614
        %v1990 = vpack.c.b16 %v1620, %v1615
        %v1991 = vpack.c.b16 %v1621, %v1616
        %v1992 = vpack.c.b16 %v1622, %v1617
        %v1993 = vpack.c.b16 %v1623, %v1618
        %v1994 = vpack.c.b16 %v1629, %v1624
        %v1995 = vpack.c.b16 %v1630, %v1625
        %v1996 = vpack.c.b16 %v1631, %v1626
        %v1997 = vpack.c.b16 %v1632, %v1627
        %v1998 = vpack.c.b16 %v1633, %v1628
        %v1999 = vpack.c.b16 %v1639, %v1634
        %v2000 = vpack.c.b16 %v1640, %v1635
        %v2001 = vpack.c.b16 %v1641, %v1636
        %v2002 = vpack.c.b16 %v1642, %v1637
        %v2003 = vpack.c.b16 %v1643, %v1638
        %v2004 = vpack.c.b16 %v1649, %v1644
        %v2005 = vpack.c.b16 %v1650, %v1645
        %v2006 = vpack.c.b16 %v1651, %v1646
        %v2007 = vpack.c.b16 %v1652, %v1647
        %v2008 = vpack.c.b16 %v1653, %v1648
        %v2009 = vpack.c.b16 %v1659, %v1654
        %v2010 = vpack.c.b16 %v1660, %v1655
        %v2011 = vpack.c.b16 %v1661, %v1656
        %v2012 = vpack.c.b16 %v1662, %v1657
        %v2013 = vpack.c.b16 %v1663, %v1658
        %v2014 = vpack.c.b16 %v1669, %v1664
        %v2015 = vpack.c.b16 %v1670, %v1665
        %v2016 = vpack.c.b16 %v1671, %v1666
        %v2017 = vpack.c.b16 %v1672, %v1667
        %v2018 = vpack.c.b16 %v1673, %v1668
        %v2019 = vpack.c.b16 %v1679, %v1674
        %v2020 = vpack.c.b16 %v1680, %v1675
        %v2021 = vpack.c.b16 %v1681, %v1676
        %v2022 = vpack.c.b16 %v1682, %v1677
        %v2023 = vpack.c.b16 %v1683, %v1678
        %v2024 = vpack.c.b16 %v1689, %v1684
        %v2025 = vpack.c.b16 %v1690, %v1685
        %v2026 = vpack.c.b16 %v1691, %v1686
        %v2027 = vpack.c.b16 %v1692, %v1687
        %v2028 = vpack.c.b16 %v1693, %v1688
        %v2029 = vpack.c.b16 %v1699, %v1694
        %v2030 = vpack.c.b16 %v1700, %v1695
        %v2031 = vpack.c.b16 %v1701, %v1696
        %v2032 = vpack.c.b16 %v1702, %v1697
        %v2033 = vpack.c.b16 %v1703, %v1698
        %v2034 = vpack.c.b16 %v1709, %v1704
        %v2035 = vpack.c.b16 %v1710, %v1705
        %v2036 = vpack.c.b16 %v1711, %v1706
        %v2037 = vpack.c.b16 %v1712, %v1707
        %v2038 = vpack.c.b16 %v1713, %v1708
        %v2039 = vpack.c.b16 %v1719, %v1714
        %v2040 = vpack.c.b16 %v1720, %v1715
        %v2041 = vpack.c.b16 %v1721, %v1716
        %v2042 = vpack.c.b16 %v1722, %v1717
        %v2043 = vpack.c.b16 %v1723, %v1718
        %v2044 = vpack.c.b16 %v1729, %v1724
        %v2045 = vpack.c.b16 %v1730, %v1725
        %v2046 = vpack.c.b16 %v1731, %v1726
        %v2047 = vpack.c.b16 %v1732, %v1727
        %v2048 = vpack.c.b16 %v1733, %v1728
        %v2049 = vpack.c.b16 %v1739, %v1734
        %v2050 = vpack.c.b16 %v1740, %v1735
        %v2051 = vpack.c.b16 %v1741, %v1736
        %v2052 = vpack.c.b16 %v1742, %v1737
        %v2053 = vpack.c.b16 %v1743, %v1738
        %v2054 = vpack.c.b16 %v1749, %v1744
        %v2055 = vpack.c.b16 %v1750, %v1745
        %v2056 = vpack.c.b16 %v1751, %v1746
        %v2057 = vpack.c.b16 %v1752, %v1747
        %v2058 = vpack.c.b16 %v1753, %v1748
        %v2059 = vpack.c.b16 %v1759, %v1754
        %v2060 = vpack.c.b16 %v1760, %v1755
        %v2061 = vpack.c.b16 %v1761, %v1756
        %v2062 = vpack.c.b16 %v1762, %v1757
        %v2063 = vpack.c.b16 %v1763, %v1758
        %v2064 = vpack.c.b16 %v1769, %v1764
        %v2065 = vpack.c.b16 %v1770, %v1765
        %v2066 = vpack.c.b16 %v1771, %v1766
        %v2067 = vpack.c.b16 %v1772, %v1767
        %v2068 = vpack.c.b16 %v1773, %v1768
        %v2069 = vpack.c.b16 %v1779, %v1774
        %v2070 = vpack.c.b16 %v1780, %v1775
        %v2071 = vpack.c.b16 %v1781, %v1776
        %v2072 = vpack.c.b16 %v1782, %v1777
        %v2073 = vpack.c.b16 %v1783, %v1778
        %v2074 = vpack.c.b16 %v1789, %v1784
        %v2075 = vpack.c.b16 %v1790, %v1785
        %v2076 = vpack.c.b16 %v1791, %v1786
        %v2077 = vpack.c.b16 %v1792, %v1787
        %v2078 = vpack.c.b16 %v1793, %v1788
        %v2079 = vpack.c.b16 %v1799, %v1794
        %v2080 = vpack.c.b16 %v1800, %v1795
        %v2081 = vpack.c.b16 %v1801, %v1796
        %v2082 = vpack.c.b16 %v1802, %v1797
        %v2083 = vpack.c.b16 %v1803, %v1798
        %v2084 = vpack.c.b16 %v1809, %v1804
        %v2085 = vpack.c.b16 %v1810, %v1805
        %v2086 = vpack.c.b16 %v1811, %v1806
        %v2087 = vpack.c.b16 %v1812, %v1807
        %v2088 = vpack.c.b16 %v1813, %v1808
        %v2089 = vpack.c.b16 %v1819, %v1814
        %v2090 = vpack.c.b16 %v1820, %v1815
        %v2091 = vpack.c.b16 %v1821, %v1816
        %v2092 = vpack.c.b16 %v1822, %v1817
        %v2093 = vpack.c.b16 %v1823, %v1818
        %v2094 = vpack.c.b16 %v1829, %v1824
        %v2095 = vpack.c.b16 %v1830, %v1825
        %v2096 = vpack.c.b16 %v1831, %v1826
        %v2097 = vpack.c.b16 %v1832, %v1827
        %v2098 = vpack.c.b16 %v1833, %v1828
        %v2099 = vpack.c.b16 %v1839, %v1834
        %v2100 = vpack.c.b16 %v1840, %v1835
        %v2101 = vpack.c.b16 %v1841, %v1836
        %v2102 = vpack.c.b16 %v1842, %v1837
        %v2103 = vpack.c.b16 %v1843, %v1838
        %v2104 = vpack.c.b16 %v1849, %v1844
        %v2105 = vpack.c.b16 %v1850, %v1845
        %v2106 = vpack.c.b16 %v1851, %v1846
        %v2107 = vpack.c.b16 %v1852, %v1847
        %v2108 = vpack.c.b16 %v1853, %v1848
        %v2109 = vpack.c.b16 %v1859, %v1854
        %v2110 = vpack.c.b16 %v1860, %v1855
        %v2111 = vpack.c.b16 %v1861, %v1856
        %v2112 = vpack.c.b16 %v1862, %v1857
        %v2113 = vpack.c.b16 %v1863, %v1858
        %vm2364 = vcmask 261120
        %v2366 = vsel %vm2364, %v743, 0
        %2368 = vmatprep.subr.bf16.mxu0 %v1900
        %2369 = vmatpush1.bf16.msra.mxu0 %v1899
        %2370 = vmatprep.subr.bf16.mxu0 %v1895
        %2371 = vmatpush1.bf16.msra.mxu0 %v1894
        %2372 = vmatprep.subr.bf16.mxu0 %v1890
        %2373 = vmatpush1.bf16.msra.mxu0 %v1889
        %2374 = vmatprep.subr.bf16.mxu0 %v1885
        %2375 = vmatpush1.bf16.msra.mxu0 %v1884
        %2376 = vmatprep.subr.bf16.mxu0 %v1880
        %2377 = vmatpush1.bf16.msra.mxu0 %v1879
        %2378 = vmatprep.subr.bf16.mxu0 %v1875
        %2379 = vmatpush1.bf16.msra.mxu0 %v1874
        %2380 = vmatprep.subr.bf16.mxu0 %v1870
        %2381 = vmatpush1.bf16.msra.mxu0 %v1869
        %2382 = vmatprep.subr.bf16.mxu0 %v1865
        %2383 = vmatpush1.bf16.msra.mxu0 %v1864
        %2384 = vmatprep.subr.bf16.mxu0 %v1940
        %2385 = vmatpush2.bf16.msra.mxu0 %v1939
        %2386 = vmatprep.subr.bf16.mxu0 %v1935
        %2387 = vmatpush2.bf16.msra.mxu0 %v1934
        %2388 = vmatprep.subr.bf16.mxu0 %v1930
        %2389 = vmatpush2.bf16.msra.mxu0 %v1929
        %2390 = vmatprep.subr.bf16.mxu0 %v1925
        %2391 = vmatpush2.bf16.msra.mxu0 %v1924
        %2392 = vmatprep.subr.bf16.mxu0 %v1920
        %2393 = vmatpush2.bf16.msra.mxu0 %v1919
        %2394 = vmatprep.subr.bf16.mxu0 %v1915
        %2395 = vmatpush2.bf16.msra.mxu0 %v1914
        %2396 = vmatprep.subr.bf16.mxu0 %v1910
        %2397 = vmatpush2.bf16.msra.mxu0 %v1909
        %2398 = vmatprep.subr.bf16.mxu0 %v1905
        %2399 = vmatpush2.bf16.msra.mxu0 %v1904
        %2400 = vmatprep.mubr.bf16.mxu0 %v738
        %2401 = vmatmul.mubr.bf16.gmra.mxu0 %v737
        %v2402 = vpop.f32.mrf.mxu0
        %v2403 = vadd.f32 %v1047, %v2402
        %v2404 = vpop.f32.mrf.mxu0
        %v2405 = vadd.f32 %v1051, %v2404
        %v2406 = vpop.f32.mrf.mxu0
        %v2407 = vpop.f32.mrf.mxu0
        %2408 = vdwg.mxu0
        %2409 = vmatprep.subr.bf16.mxu0 %v1980
        %2410 = vmatpush1.bf16.msra.mxu0 %v1979
        %2411 = vmatprep.subr.bf16.mxu0 %v1975
        %2412 = vmatpush1.bf16.msra.mxu0 %v1974
        %2413 = vmatprep.subr.bf16.mxu0 %v1970
        %2414 = vmatpush1.bf16.msra.mxu0 %v1969
        %2415 = vmatprep.subr.bf16.mxu0 %v1965
        %2416 = vmatpush1.bf16.msra.mxu0 %v1964
        %2417 = vmatprep.subr.bf16.mxu0 %v1960
        %2418 = vmatpush1.bf16.msra.mxu0 %v1959
        %2419 = vmatprep.subr.bf16.mxu0 %v1955
        %2420 = vmatpush1.bf16.msra.mxu0 %v1954
        %2421 = vmatprep.subr.bf16.mxu0 %v1950
        %2422 = vmatpush1.bf16.msra.mxu0 %v1949
        %2423 = vmatprep.subr.bf16.mxu0 %v1945
        %2424 = vmatpush1.bf16.msra.mxu0 %v1944
        %2425 = vmatprep.subr.bf16.mxu0 %v2020
        %2426 = vmatpush2.bf16.msra.mxu0 %v2019
        %2427 = vmatprep.subr.bf16.mxu0 %v2015
        %2428 = vmatpush2.bf16.msra.mxu0 %v2014
        %2429 = vmatprep.subr.bf16.mxu0 %v2010
        %2430 = vmatpush2.bf16.msra.mxu0 %v2009
        %2431 = vmatprep.subr.bf16.mxu0 %v2005
        %2432 = vmatpush2.bf16.msra.mxu0 %v2004
        %2433 = vmatprep.subr.bf16.mxu0 %v2000
        %2434 = vmatpush2.bf16.msra.mxu0 %v1999
        %2435 = vmatprep.subr.bf16.mxu0 %v1995
        %2436 = vmatpush2.bf16.msra.mxu0 %v1994
        %2437 = vmatprep.subr.bf16.mxu0 %v1990
        %2438 = vmatpush2.bf16.msra.mxu0 %v1989
        %2439 = vmatprep.subr.bf16.mxu0 %v1985
        %2440 = vmatpush2.bf16.msra.mxu0 %v1984
        %2441 = vmatprep.mubr.bf16.mxu0 %v740
        %2442 = vmatmul.mubr.bf16.gmra.mxu0 %v739
        %v2443 = vpop.f32.mrf.mxu0
        %v2444 = vadd.f32 %v2403, %v2443
        %v2445 = vpop.f32.mrf.mxu0
        %v2446 = vadd.f32 %v2405, %v2445
        %v2447 = vpop.f32.mrf.mxu0
        %v2448 = vpop.f32.mrf.mxu0
        %2449 = vdwg.mxu0
        %2450 = vmatprep.subr.bf16.mxu0 %v2060
        %2451 = vmatpush1.bf16.msra.mxu0 %v2059
        %2452 = vmatprep.subr.bf16.mxu0 %v2055
        %2453 = vmatpush1.bf16.msra.mxu0 %v2054
        %2454 = vmatprep.subr.bf16.mxu0 %v2050
        %2455 = vmatpush1.bf16.msra.mxu0 %v2049
        %2456 = vmatprep.subr.bf16.mxu0 %v2045
        %2457 = vmatpush1.bf16.msra.mxu0 %v2044
        %2458 = vmatprep.subr.bf16.mxu0 %v2040
        %2459 = vmatpush1.bf16.msra.mxu0 %v2039
        %2460 = vmatprep.subr.bf16.mxu0 %v2035
        %2461 = vmatpush1.bf16.msra.mxu0 %v2034
        %2462 = vmatprep.subr.bf16.mxu0 %v2030
        %2463 = vmatpush1.bf16.msra.mxu0 %v2029
        %2464 = vmatprep.subr.bf16.mxu0 %v2025
        %2465 = vmatpush1.bf16.msra.mxu0 %v2024
        %2466 = vmatprep.subr.bf16.mxu0 %v2100
        %2467 = vmatpush2.bf16.msra.mxu0 %v2099
        %2468 = vmatprep.subr.bf16.mxu0 %v2095
        %2469 = vmatpush2.bf16.msra.mxu0 %v2094
        %2470 = vmatprep.subr.bf16.mxu0 %v2090
        %2471 = vmatpush2.bf16.msra.mxu0 %v2089
        %2472 = vmatprep.subr.bf16.mxu0 %v2085
        %2473 = vmatpush2.bf16.msra.mxu0 %v2084
        %2474 = vmatprep.subr.bf16.mxu0 %v2080
        %2475 = vmatpush2.bf16.msra.mxu0 %v2079
        %2476 = vmatprep.subr.bf16.mxu0 %v2075
        %2477 = vmatpush2.bf16.msra.mxu0 %v2074
        %2478 = vmatprep.subr.bf16.mxu0 %v2070
        %2479 = vmatpush2.bf16.msra.mxu0 %v2069
        %2480 = vmatprep.subr.bf16.mxu0 %v2065
        %2481 = vmatpush2.bf16.msra.mxu0 %v2064
        %2482 = vmatprep.mubr.bf16.mxu0 %v742
        %2483 = vmatmul.mubr.bf16.gmra.mxu0 %v741
        %v2484 = vpop.f32.mrf.mxu0
        %v2485 = vadd.f32 %v2444, %v2484
        %v2486 = vpop.f32.mrf.mxu0
        %v2487 = vadd.f32 %v2446, %v2486
        %v2488 = vpop.f32.mrf.mxu0
        %v2489 = vpop.f32.mrf.mxu0
        %2490 = vdwg.mxu0
        %2491 = vmatprep.subr.bf16.mxu0 0
        %2492 = vmatpush1.bf16.msra.mxu0 0
        %2493 = vmatprep.subr.bf16.mxu0 0
        %2494 = vmatpush1.bf16.msra.mxu0 0
        %2495 = vmatprep.subr.bf16.mxu0 0
        %2496 = vmatpush1.bf16.msra.mxu0 0
        %2497 = vmatprep.subr.bf16.mxu0 0
        %2498 = vmatpush1.bf16.msra.mxu0 0
        %2499 = vmatprep.subr.bf16.mxu0 0
        %2500 = vmatpush1.bf16.msra.mxu0 0
        %2501 = vmatprep.subr.bf16.mxu0 0
        %2502 = vmatpush1.bf16.msra.mxu0 0
        %2503 = vmatprep.subr.bf16.mxu0 %v2110
        %2504 = vmatpush1.bf16.msra.mxu0 %v2109
        %2505 = vmatprep.subr.bf16.mxu0 %v2105
        %2506 = vmatpush1.bf16.msra.mxu0 %v2104
        %2507 = vmatprep.subr.bf16.mxu0 0
        %2508 = vmatpush2.bf16.msra.mxu0 0
        %2509 = vmatprep.subr.bf16.mxu0 0
        %2510 = vmatpush2.bf16.msra.mxu0 0
        %2511 = vmatprep.subr.bf16.mxu0 0
        %2512 = vmatpush2.bf16.msra.mxu0 0
        %2513 = vmatprep.subr.bf16.mxu0 0
        %2514 = vmatpush2.bf16.msra.mxu0 0
        %2515 = vmatprep.subr.bf16.mxu0 0
        %2516 = vmatpush2.bf16.msra.mxu0 0
        %2517 = vmatprep.subr.bf16.mxu0 0
        %2518 = vmatpush2.bf16.msra.mxu0 0
        %2519 = vmatprep.subr.bf16.mxu0 0
        %2520 = vmatpush2.bf16.msra.mxu0 0
        %2521 = vmatprep.subr.bf16.mxu0 0
        %2522 = vmatpush2.bf16.msra.mxu0 0
        %2523 = vmatprep.mubr.bf16.mxu0 0
        %2524 = vmatmul.mubr.bf16.gmra.mxu0 %v2366
        %v2525 = vpop.f32.mrf.mxu0
        %v2526 = vadd.f32 %v2485, %v2525
        %v2527 = vpop.f32.mrf.mxu0
        %v2528 = vadd.f32 %v2487, %v2527
        %v2529 = vpop.f32.mrf.mxu0
        %v2530 = vpop.f32.mrf.mxu0
        %2531 = vdwg.mxu0
        %2532 = vmatprep.subr.bf16.mxu0 %v1902
        %2533 = vmatpush1.bf16.msra.mxu0 %v1901
        %2534 = vmatprep.subr.bf16.mxu0 %v1897
        %2535 = vmatpush1.bf16.msra.mxu0 %v1896
        %2536 = vmatprep.subr.bf16.mxu0 %v1892
        %2537 = vmatpush1.bf16.msra.mxu0 %v1891
        %2538 = vmatprep.subr.bf16.mxu0 %v1887
        %2539 = vmatpush1.bf16.msra.mxu0 %v1886
        %2540 = vmatprep.subr.bf16.mxu0 %v1882
        %2541 = vmatpush1.bf16.msra.mxu0 %v1881
        %2542 = vmatprep.subr.bf16.mxu0 %v1877
        %2543 = vmatpush1.bf16.msra.mxu0 %v1876
        %2544 = vmatprep.subr.bf16.mxu0 %v1872
        %2545 = vmatpush1.bf16.msra.mxu0 %v1871
        %2546 = vmatprep.subr.bf16.mxu0 %v1867
        %2547 = vmatpush1.bf16.msra.mxu0 %v1866
        %2548 = vmatprep.subr.bf16.mxu0 %v1942
        %2549 = vmatpush2.bf16.msra.mxu0 %v1941
        %2550 = vmatprep.subr.bf16.mxu0 %v1937
        %2551 = vmatpush2.bf16.msra.mxu0 %v1936
        %2552 = vmatprep.subr.bf16.mxu0 %v1932
        %2553 = vmatpush2.bf16.msra.mxu0 %v1931
        %2554 = vmatprep.subr.bf16.mxu0 %v1927
        %2555 = vmatpush2.bf16.msra.mxu0 %v1926
        %2556 = vmatprep.subr.bf16.mxu0 %v1922
        %2557 = vmatpush2.bf16.msra.mxu0 %v1921
        %2558 = vmatprep.subr.bf16.mxu0 %v1917
        %2559 = vmatpush2.bf16.msra.mxu0 %v1916
        %2560 = vmatprep.subr.bf16.mxu0 %v1912
        %2561 = vmatpush2.bf16.msra.mxu0 %v1911
        %2562 = vmatprep.subr.bf16.mxu0 %v1907
        %2563 = vmatpush2.bf16.msra.mxu0 %v1906
        %2564 = vmatprep.mubr.bf16.mxu0 %v738
        %2565 = vmatmul.mubr.bf16.gmra.mxu0 %v737
        %v2566 = vpop.f32.mrf.mxu0
        %v2567 = vadd.f32 %v1055, %v2566
        %v2568 = vpop.f32.mrf.mxu0
        %v2569 = vadd.f32 %v1059, %v2568
        %v2570 = vpop.f32.mrf.mxu0
        %v2571 = vpop.f32.mrf.mxu0
        %2572 = vdwg.mxu0
        %2573 = vmatprep.subr.bf16.mxu0 %v1982
        %2574 = vmatpush1.bf16.msra.mxu0 %v1981
        %2575 = vmatprep.subr.bf16.mxu0 %v1977
        %2576 = vmatpush1.bf16.msra.mxu0 %v1976
        %2577 = vmatprep.subr.bf16.mxu0 %v1972
        %2578 = vmatpush1.bf16.msra.mxu0 %v1971
        %2579 = vmatprep.subr.bf16.mxu0 %v1967
        %2580 = vmatpush1.bf16.msra.mxu0 %v1966
        %2581 = vmatprep.subr.bf16.mxu0 %v1962
        %2582 = vmatpush1.bf16.msra.mxu0 %v1961
        %2583 = vmatprep.subr.bf16.mxu0 %v1957
        %2584 = vmatpush1.bf16.msra.mxu0 %v1956
        %2585 = vmatprep.subr.bf16.mxu0 %v1952
        %2586 = vmatpush1.bf16.msra.mxu0 %v1951
        %2587 = vmatprep.subr.bf16.mxu0 %v1947
        %2588 = vmatpush1.bf16.msra.mxu0 %v1946
        %2589 = vmatprep.subr.bf16.mxu0 %v2022
        %2590 = vmatpush2.bf16.msra.mxu0 %v2021
        %2591 = vmatprep.subr.bf16.mxu0 %v2017
        %2592 = vmatpush2.bf16.msra.mxu0 %v2016
        %2593 = vmatprep.subr.bf16.mxu0 %v2012
        %2594 = vmatpush2.bf16.msra.mxu0 %v2011
        %2595 = vmatprep.subr.bf16.mxu0 %v2007
        %2596 = vmatpush2.bf16.msra.mxu0 %v2006
        %2597 = vmatprep.subr.bf16.mxu0 %v2002
        %2598 = vmatpush2.bf16.msra.mxu0 %v2001
        %2599 = vmatprep.subr.bf16.mxu0 %v1997
        %2600 = vmatpush2.bf16.msra.mxu0 %v1996
        %2601 = vmatprep.subr.bf16.mxu0 %v1992
        %2602 = vmatpush2.bf16.msra.mxu0 %v1991
        %2603 = vmatprep.subr.bf16.mxu0 %v1987
        %2604 = vmatpush2.bf16.msra.mxu0 %v1986
        %2605 = vmatprep.mubr.bf16.mxu0 %v740
        %2606 = vmatmul.mubr.bf16.gmra.mxu0 %v739
        %v2607 = vpop.f32.mrf.mxu0
        %v2608 = vadd.f32 %v2567, %v2607
        %v2609 = vpop.f32.mrf.mxu0
        %v2610 = vadd.f32 %v2569, %v2609
        %v2611 = vpop.f32.mrf.mxu0
        %v2612 = vpop.f32.mrf.mxu0
        %2613 = vdwg.mxu0
        %2614 = vmatprep.subr.bf16.mxu0 %v2062
        %2615 = vmatpush1.bf16.msra.mxu0 %v2061
        %2616 = vmatprep.subr.bf16.mxu0 %v2057
        %2617 = vmatpush1.bf16.msra.mxu0 %v2056
        %2618 = vmatprep.subr.bf16.mxu0 %v2052
        %2619 = vmatpush1.bf16.msra.mxu0 %v2051
        %2620 = vmatprep.subr.bf16.mxu0 %v2047
        %2621 = vmatpush1.bf16.msra.mxu0 %v2046
        %2622 = vmatprep.subr.bf16.mxu0 %v2042
        %2623 = vmatpush1.bf16.msra.mxu0 %v2041
        %2624 = vmatprep.subr.bf16.mxu0 %v2037
        %2625 = vmatpush1.bf16.msra.mxu0 %v2036
        %2626 = vmatprep.subr.bf16.mxu0 %v2032
        %2627 = vmatpush1.bf16.msra.mxu0 %v2031
        %2628 = vmatprep.subr.bf16.mxu0 %v2027
        %2629 = vmatpush1.bf16.msra.mxu0 %v2026
        %2630 = vmatprep.subr.bf16.mxu0 %v2102
        %2631 = vmatpush2.bf16.msra.mxu0 %v2101
        %2632 = vmatprep.subr.bf16.mxu0 %v2097
        %2633 = vmatpush2.bf16.msra.mxu0 %v2096
        %2634 = vmatprep.subr.bf16.mxu0 %v2092
        %2635 = vmatpush2.bf16.msra.mxu0 %v2091
        %2636 = vmatprep.subr.bf16.mxu0 %v2087
        %2637 = vmatpush2.bf16.msra.mxu0 %v2086
        %2638 = vmatprep.subr.bf16.mxu0 %v2082
        %2639 = vmatpush2.bf16.msra.mxu0 %v2081
        %2640 = vmatprep.subr.bf16.mxu0 %v2077
        %2641 = vmatpush2.bf16.msra.mxu0 %v2076
        %2642 = vmatprep.subr.bf16.mxu0 %v2072
        %2643 = vmatpush2.bf16.msra.mxu0 %v2071
        %2644 = vmatprep.subr.bf16.mxu0 %v2067
        %2645 = vmatpush2.bf16.msra.mxu0 %v2066
        %2646 = vmatprep.mubr.bf16.mxu0 %v742
        %2647 = vmatmul.mubr.bf16.gmra.mxu0 %v741
        %v2648 = vpop.f32.mrf.mxu0
        %v2649 = vadd.f32 %v2608, %v2648
        %v2650 = vpop.f32.mrf.mxu0
        %v2651 = vadd.f32 %v2610, %v2650
        %v2652 = vpop.f32.mrf.mxu0
        %v2653 = vpop.f32.mrf.mxu0
        %2654 = vdwg.mxu0
        %2655 = vmatprep.subr.bf16.mxu0 0
        %2656 = vmatpush1.bf16.msra.mxu0 0
        %2657 = vmatprep.subr.bf16.mxu0 0
        %2658 = vmatpush1.bf16.msra.mxu0 0
        %2659 = vmatprep.subr.bf16.mxu0 0
        %2660 = vmatpush1.bf16.msra.mxu0 0
        %2661 = vmatprep.subr.bf16.mxu0 0
        %2662 = vmatpush1.bf16.msra.mxu0 0
        %2663 = vmatprep.subr.bf16.mxu0 0
        %2664 = vmatpush1.bf16.msra.mxu0 0
        %2665 = vmatprep.subr.bf16.mxu0 0
        %2666 = vmatpush1.bf16.msra.mxu0 0
        %2667 = vmatprep.subr.bf16.mxu0 %v2112
        %2668 = vmatpush1.bf16.msra.mxu0 %v2111
        %2669 = vmatprep.subr.bf16.mxu0 %v2107
        %2670 = vmatpush1.bf16.msra.mxu0 %v2106
        %2671 = vmatprep.subr.bf16.mxu0 0
        %2672 = vmatpush2.bf16.msra.mxu0 0
        %2673 = vmatprep.subr.bf16.mxu0 0
        %2674 = vmatpush2.bf16.msra.mxu0 0
        %2675 = vmatprep.subr.bf16.mxu0 0
        %2676 = vmatpush2.bf16.msra.mxu0 0
        %2677 = vmatprep.subr.bf16.mxu0 0
        %2678 = vmatpush2.bf16.msra.mxu0 0
        %2679 = vmatprep.subr.bf16.mxu0 0
        %2680 = vmatpush2.bf16.msra.mxu0 0
        %2681 = vmatprep.subr.bf16.mxu0 0
        %2682 = vmatpush2.bf16.msra.mxu0 0
        %2683 = vmatprep.subr.bf16.mxu0 0
        %2684 = vmatpush2.bf16.msra.mxu0 0
        %2685 = vmatprep.subr.bf16.mxu0 0
        %2686 = vmatpush2.bf16.msra.mxu0 0
        %2687 = vmatprep.mubr.bf16.mxu0 0
        %2688 = vmatmul.mubr.bf16.gmra.mxu0 %v2366
        %v2689 = vpop.f32.mrf.mxu0
        %v2690 = vadd.f32 %v2649, %v2689
        %v2691 = vpop.f32.mrf.mxu0
        %v2692 = vadd.f32 %v2651, %v2691
        %v2693 = vpop.f32.mrf.mxu0
        %v2694 = vpop.f32.mrf.mxu0
        %2695 = vdwg.mxu0
        %2696 = vmatprep.subr.bf16.mxu0 0
        %2697 = vmatpush1.bf16.msra.mxu0 %v1903
        %2698 = vmatprep.subr.bf16.mxu0 0
        %2699 = vmatpush1.bf16.msra.mxu0 %v1898
        %2700 = vmatprep.subr.bf16.mxu0 0
        %2701 = vmatpush1.bf16.msra.mxu0 %v1893
        %2702 = vmatprep.subr.bf16.mxu0 0
        %2703 = vmatpush1.bf16.msra.mxu0 %v1888
        %2704 = vmatprep.subr.bf16.mxu0 0
        %2705 = vmatpush1.bf16.msra.mxu0 %v1883
        %2706 = vmatprep.subr.bf16.mxu0 0
        %2707 = vmatpush1.bf16.msra.mxu0 %v1878
        %2708 = vmatprep.subr.bf16.mxu0 0
        %2709 = vmatpush1.bf16.msra.mxu0 %v1873
        %2710 = vmatprep.subr.bf16.mxu0 0
        %2711 = vmatpush1.bf16.msra.mxu0 %v1868
        %2712 = vmatprep.subr.bf16.mxu0 0
        %2713 = vmatpush2.bf16.msra.mxu0 %v1943
        %2714 = vmatprep.subr.bf16.mxu0 0
        %2715 = vmatpush2.bf16.msra.mxu0 %v1938
        %2716 = vmatprep.subr.bf16.mxu0 0
        %2717 = vmatpush2.bf16.msra.mxu0 %v1933
        %2718 = vmatprep.subr.bf16.mxu0 0
        %2719 = vmatpush2.bf16.msra.mxu0 %v1928
        %2720 = vmatprep.subr.bf16.mxu0 0
        %2721 = vmatpush2.bf16.msra.mxu0 %v1923
        %2722 = vmatprep.subr.bf16.mxu0 0
        %2723 = vmatpush2.bf16.msra.mxu0 %v1918
        %2724 = vmatprep.subr.bf16.mxu0 0
        %2725 = vmatpush2.bf16.msra.mxu0 %v1913
        %2726 = vmatprep.subr.bf16.mxu0 0
        %2727 = vmatpush2.bf16.msra.mxu0 %v1908
        %2728 = vmatprep.mubr.bf16.mxu0 %v738
        %2729 = vmatmul.mubr.bf16.gmra.mxu0 %v737
        %v2730 = vpop.f32.mrf.mxu0
        %v2731 = vadd.f32 %v1063, %v2730
        %v2732 = vpop.f32.mrf.mxu0
        %v2733 = vpop.f32.mrf.mxu0
        %v2734 = vpop.f32.mrf.mxu0
        %2735 = vdwg.mxu0
        %2736 = vmatprep.subr.bf16.mxu0 0
        %2737 = vmatpush1.bf16.msra.mxu0 %v1983
        %2738 = vmatprep.subr.bf16.mxu0 0
        %2739 = vmatpush1.bf16.msra.mxu0 %v1978
        %2740 = vmatprep.subr.bf16.mxu0 0
        %2741 = vmatpush1.bf16.msra.mxu0 %v1973
        %2742 = vmatprep.subr.bf16.mxu0 0
        %2743 = vmatpush1.bf16.msra.mxu0 %v1968
        %2744 = vmatprep.subr.bf16.mxu0 0
        %2745 = vmatpush1.bf16.msra.mxu0 %v1963
        %2746 = vmatprep.subr.bf16.mxu0 0
        %2747 = vmatpush1.bf16.msra.mxu0 %v1958
        %2748 = vmatprep.subr.bf16.mxu0 0
        %2749 = vmatpush1.bf16.msra.mxu0 %v1953
        %2750 = vmatprep.subr.bf16.mxu0 0
        %2751 = vmatpush1.bf16.msra.mxu0 %v1948
        %2752 = vmatprep.subr.bf16.mxu0 0
        %2753 = vmatpush2.bf16.msra.mxu0 %v2023
        %2754 = vmatprep.subr.bf16.mxu0 0
        %2755 = vmatpush2.bf16.msra.mxu0 %v2018
        %2756 = vmatprep.subr.bf16.mxu0 0
        %2757 = vmatpush2.bf16.msra.mxu0 %v2013
        %2758 = vmatprep.subr.bf16.mxu0 0
        %2759 = vmatpush2.bf16.msra.mxu0 %v2008
        %2760 = vmatprep.subr.bf16.mxu0 0
        %2761 = vmatpush2.bf16.msra.mxu0 %v2003
        %2762 = vmatprep.subr.bf16.mxu0 0
        %2763 = vmatpush2.bf16.msra.mxu0 %v1998
        %2764 = vmatprep.subr.bf16.mxu0 0
        %2765 = vmatpush2.bf16.msra.mxu0 %v1993
        %2766 = vmatprep.subr.bf16.mxu0 0
        %2767 = vmatpush2.bf16.msra.mxu0 %v1988
        %2768 = vmatprep.mubr.bf16.mxu0 %v740
        %2769 = vmatmul.mubr.bf16.gmra.mxu0 %v739
        %v2770 = vpop.f32.mrf.mxu0
        %v2771 = vadd.f32 %v2731, %v2770
        %v2772 = vpop.f32.mrf.mxu0
        %v2773 = vpop.f32.mrf.mxu0
        %v2774 = vpop.f32.mrf.mxu0
        %2775 = vdwg.mxu0
        %2776 = vmatprep.subr.bf16.mxu0 0
        %2777 = vmatpush1.bf16.msra.mxu0 %v2063
        %2778 = vmatprep.subr.bf16.mxu0 0
        %2779 = vmatpush1.bf16.msra.mxu0 %v2058
        %2780 = vmatprep.subr.bf16.mxu0 0
        %2781 = vmatpush1.bf16.msra.mxu0 %v2053
        %2782 = vmatprep.subr.bf16.mxu0 0
        %2783 = vmatpush1.bf16.msra.mxu0 %v2048
        %2784 = vmatprep.subr.bf16.mxu0 0
        %2785 = vmatpush1.bf16.msra.mxu0 %v2043
        %2786 = vmatprep.subr.bf16.mxu0 0
        %2787 = vmatpush1.bf16.msra.mxu0 %v2038
        %2788 = vmatprep.subr.bf16.mxu0 0
        %2789 = vmatpush1.bf16.msra.mxu0 %v2033
        %2790 = vmatprep.subr.bf16.mxu0 0
        %2791 = vmatpush1.bf16.msra.mxu0 %v2028
        %2792 = vmatprep.subr.bf16.mxu0 0
        %2793 = vmatpush2.bf16.msra.mxu0 %v2103
        %2794 = vmatprep.subr.bf16.mxu0 0
        %2795 = vmatpush2.bf16.msra.mxu0 %v2098
        %2796 = vmatprep.subr.bf16.mxu0 0
        %2797 = vmatpush2.bf16.msra.mxu0 %v2093
        %2798 = vmatprep.subr.bf16.mxu0 0
        %2799 = vmatpush2.bf16.msra.mxu0 %v2088
        %2800 = vmatprep.subr.bf16.mxu0 0
        %2801 = vmatpush2.bf16.msra.mxu0 %v2083
        %2802 = vmatprep.subr.bf16.mxu0 0
        %2803 = vmatpush2.bf16.msra.mxu0 %v2078
        %2804 = vmatprep.subr.bf16.mxu0 0
        %2805 = vmatpush2.bf16.msra.mxu0 %v2073
        %2806 = vmatprep.subr.bf16.mxu0 0
        %2807 = vmatpush2.bf16.msra.mxu0 %v2068
        %2808 = vmatprep.mubr.bf16.mxu0 %v742
        %2809 = vmatmul.mubr.bf16.gmra.mxu0 %v741
        %v2810 = vpop.f32.mrf.mxu0
        %v2811 = vadd.f32 %v2771, %v2810
        %v2812 = vpop.f32.mrf.mxu0
        %v2813 = vpop.f32.mrf.mxu0
        %v2814 = vpop.f32.mrf.mxu0
        %2815 = vdwg.mxu0
        %2816 = vmatprep.subr.bf16.mxu0 0
        %2817 = vmatpush1.bf16.msra.mxu0 0
        %2818 = vmatprep.subr.bf16.mxu0 0
        %2819 = vmatpush1.bf16.msra.mxu0 0
        %2820 = vmatprep.subr.bf16.mxu0 0
        %2821 = vmatpush1.bf16.msra.mxu0 0
        %2822 = vmatprep.subr.bf16.mxu0 0
        %2823 = vmatpush1.bf16.msra.mxu0 0
        %2824 = vmatprep.subr.bf16.mxu0 0
        %2825 = vmatpush1.bf16.msra.mxu0 0
        %2826 = vmatprep.subr.bf16.mxu0 0
        %2827 = vmatpush1.bf16.msra.mxu0 0
        %2828 = vmatprep.subr.bf16.mxu0 0
        %2829 = vmatpush1.bf16.msra.mxu0 %v2113
        %2830 = vmatprep.subr.bf16.mxu0 0
        %2831 = vmatpush1.bf16.msra.mxu0 %v2108
        %2832 = vmatprep.subr.bf16.mxu0 0
        %2833 = vmatpush2.bf16.msra.mxu0 0
        %2834 = vmatprep.subr.bf16.mxu0 0
        %2835 = vmatpush2.bf16.msra.mxu0 0
        %2836 = vmatprep.subr.bf16.mxu0 0
        %2837 = vmatpush2.bf16.msra.mxu0 0
        %2838 = vmatprep.subr.bf16.mxu0 0
        %2839 = vmatpush2.bf16.msra.mxu0 0
        %2840 = vmatprep.subr.bf16.mxu0 0
        %2841 = vmatpush2.bf16.msra.mxu0 0
        %2842 = vmatprep.subr.bf16.mxu0 0
        %2843 = vmatpush2.bf16.msra.mxu0 0
        %2844 = vmatprep.subr.bf16.mxu0 0
        %2845 = vmatpush2.bf16.msra.mxu0 0
        %2846 = vmatprep.subr.bf16.mxu0 0
        %2847 = vmatpush2.bf16.msra.mxu0 0
        %2848 = vmatprep.mubr.bf16.mxu0 0
        %2849 = vmatmul.mubr.bf16.gmra.mxu0 %v2366
        %v2850 = vpop.f32.mrf.mxu0
        %v2851 = vadd.f32 %v2811, %v2850
        %v2852 = vpop.f32.mrf.mxu0
        %v2853 = vpop.f32.mrf.mxu0
        %v2854 = vpop.f32.mrf.mxu0
        %2855 = vdwg.mxu0
        %2857 = vset.pattern.permute.xlu0 0
        %2858 = vperm.xlu0 %2857, %v357
        %v2859 = vpop.permute.xlu0 %2858
        %v2861 = vlaneseq
        %v2862 = vshrl.u32 %v2861, 7
        %v2863 = vsub.s32 1, %v2862
        %v2864 = vrot.slane %v358, %v2863
        %v2865 = vlaneseq
        %v2866 = vshrl.u32 %v2865, 7
        %v2867 = vsub.s32 1, %v2866
        %v2868 = vrot.slane %v359, %v2867
        %v2869 = vlaneseq
        %v2870 = vshrl.u32 %v2869, 7
        %v2871 = vsub.s32 1, %v2870
        %v2872 = vrot.slane %v360, %v2871
        %v2873 = vlaneseq
        %v2874 = vshrl.u32 %v2873, 7
        %v2875 = vsub.s32 1, %v2874
        %v2876 = vrot.slane %v361, %v2875
        %v2877 = vlaneseq
        %v2878 = vshrl.u32 %v2877, 7
        %v2879 = vsub.s32 1, %v2878
        %v2880 = vrot.slane %v362, %v2879
        %v2881 = vmul.f32 %v2859, %v2864
        %v2882 = vmul.f32 %v2859, %v2868
        %v2883 = vmul.f32 %v2859, %v2872
        %v2884 = vmul.f32 %v2859, %v2876
        %v2885 = vmul.f32 %v2859, %v2880
        %v2886 = vadd.f32 %v2526, %v2881
        %v2887 = vadd.f32 %v2528, %v2882
        %v2888 = vadd.f32 %v2690, %v2883
        %v2889 = vadd.f32 %v2692, %v2884
        %v2890 = vadd.f32 %v2851, %v2885
        %2891 = vset.pattern.permute.xlu0 1
        %2892 = vperm.xlu0 %2891, %v357
        %v2893 = vpop.permute.xlu0 %2892
        %v2895 = vlaneseq
        %v2896 = vshrl.u32 %v2895, 7
        %v2897 = vsub.s32 2, %v2896
        %v2898 = vrot.slane %v358, %v2897
        %v2899 = vlaneseq
        %v2900 = vshrl.u32 %v2899, 7
        %v2901 = vsub.s32 2, %v2900
        %v2902 = vrot.slane %v359, %v2901
        %v2903 = vlaneseq
        %v2904 = vshrl.u32 %v2903, 7
        %v2905 = vsub.s32 2, %v2904
        %v2906 = vrot.slane %v360, %v2905
        %v2907 = vlaneseq
        %v2908 = vshrl.u32 %v2907, 7
        %v2909 = vsub.s32 2, %v2908
        %v2910 = vrot.slane %v361, %v2909
        %v2911 = vlaneseq
        %v2912 = vshrl.u32 %v2911, 7
        %v2913 = vsub.s32 2, %v2912
        %v2914 = vrot.slane %v362, %v2913
        %v2915 = vmul.f32 %v2893, %v2898
        %v2916 = vmul.f32 %v2893, %v2902
        %v2917 = vmul.f32 %v2893, %v2906
        %v2918 = vmul.f32 %v2893, %v2910
        %v2919 = vmul.f32 %v2893, %v2914
        %v2920 = vadd.f32 %v2886, %v2915
        %v2921 = vadd.f32 %v2887, %v2916
        %v2922 = vadd.f32 %v2888, %v2917
        %v2923 = vadd.f32 %v2889, %v2918
        %v2924 = vadd.f32 %v2890, %v2919
        %v2925 = vmax.f32 %v2920, 0.0
        %v2926 = vmax.f32 %v2921, 0.0
        %v2927 = vmax.f32 %v2922, 0.0
        %v2928 = vmax.f32 %v2923, 0.0
        %v2929 = vmax.f32 %v2924, 0.0
        %v2930 = vlaneseq
        %v2931 = vshrl.u32 %v2930, 7
        %v2932 = vsub.s32 4, %v2931
        %v2933 = vrot.slane %v358, %v2932
        %v2934 = vlaneseq
        %v2935 = vshrl.u32 %v2934, 7
        %v2936 = vsub.s32 4, %v2935
        %v2937 = vrot.slane %v359, %v2936
        %v2938 = vlaneseq
        %v2939 = vshrl.u32 %v2938, 7
        %v2940 = vsub.s32 4, %v2939
        %v2941 = vrot.slane %v360, %v2940
        %v2942 = vlaneseq
        %v2943 = vshrl.u32 %v2942, 7
        %v2944 = vsub.s32 4, %v2943
        %v2945 = vrot.slane %v361, %v2944
        %v2946 = vlaneseq
        %v2947 = vshrl.u32 %v2946, 7
        %v2948 = vsub.s32 4, %v2947
        %v2949 = vrot.slane %v362, %v2948
        %v2950 = vmul.f32 %v2925, %v2933
        %v2951 = vmul.f32 %v2926, %v2937
        %v2952 = vmul.f32 %v2927, %v2941
        %v2953 = vmul.f32 %v2928, %v2945
        %v2954 = vmul.f32 %v2929, %v2949
        %vm2955 = vcmask 1041408
        %v2956 = vsel %vm2955, %v2950, 0.0
        %v2957 = vsel %vm2955, %v2951, 0.0
        %v2958 = vadd.f32 %v2956, %v2957
        %v2959 = vsel %vm2955, %v2952, 0.0
        %v2960 = vadd.f32 %v2958, %v2959
        %v2961 = vsel %vm2955, %v2953, 0.0
        %v2962 = vadd.f32 %v2960, %v2961
        %vm2963 = vcmask 713728
        %v2964 = vsel %vm2963, %v2954, 0.0
        %v2965 = vadd.f32 %v2962, %v2964
        %2966 = vadd.xlane.f32.xlu0 %v2965
        %v2967 = vpop.xlane.xlu0 %2966
        %v2968 = vlaneseq
        %v2969 = vshrl.u32 %v2968, 7
        %v2970 = vsub.s32 5, %v2969
        %v2971 = vrot.slane %v358, %v2970
        %v2972 = vadd.f32 %v2967, %v2971
        %vm2973 = vcmask 1024
        %2974 = vst.msk [vmem:[%s354] sm:$0x3] %vm2973, %v2972
        %p2975 = scmp.lt.s32.totalorder %s22, 1
        %s2976 = scalar_select %p2975, %s22, 1
        %p2977 = scmp.lt.s32.totalorder %s23, 0
        %s2978 = scalar_select %p2977, %s23, 0
        %s2979 = sadd.s32 %s2978, %s2976
        %s2980 = smul.addr %s2979, 2
        %s2981 = scalar_lea.vmem %s5, %s2980
        // Predicated region
        $region57: #{tpu_custom_call.1} parent=39 // pred_check
          %p2982 = pneg %p180
        $region58: #{tpu_custom_call.1} parent=39 // pred_check_branch
          %2984 = sbr.rel (%p2982) target = $region60
        $region59: #{tpu_custom_call.1} parent=39 // pred_region
          _
        $region60: #{tpu_custom_call.1} parent=39 // pred_fallthru
          _
      $region40: #{tpu_custom_call.1} parent=5 // pred_fallthru
        _
      %p2985 = scmp.le.s32.totalorder 2, %s13
      // Predicated region
      $region61: #{tpu_custom_call.1} parent=5 // pred_check
        %p2986 = pneg %p2985
      $region62: #{tpu_custom_call.1} parent=5 // pred_check_branch
        %2988 = sbr.rel (%p2986) target = $region64
      $region63: #{tpu_custom_call.1} parent=5 // pred_region
        %s2989 = ssub.s32 %s13, 2
        // Predicated region
        $region65: #{tpu_custom_call.1} parent=63 // pred_check
          %p2990 = pneg %p186
        $region66: #{tpu_custom_call.1} parent=63 // pred_check_branch
          %2992 = sbr.rel (%p2990) target = $region68
        $region67: #{tpu_custom_call.1} parent=63 // pred_region
          %p2993 = scmp.lt.s32.totalorder %s24, 1
          %s2994 = scalar_select %p2993, %s24, 1
          %p2995 = scmp.lt.s32.totalorder %s25, 0
          %s2996 = scalar_select %p2995, %s25, 0
          %s2997 = sadd.s32 %s2996, %s2994
          %s2998 = smul.addr %s2997, 2
          %s2999 = scalar_lea.vmem %s5, %s2998
        $region68: #{tpu_custom_call.1} parent=63 // pred_fallthru
          _
      $region64: #{tpu_custom_call.1} parent=5 // pred_fallthru
        _
    $region6: #{tpu_custom_call.1} parent=1 // loop_footer
      %s17 = sadd.s32 1, %s13
    $region7: #{tpu_custom_call.1} parent=1 // loop_footer_branch
      %12 = sbr.rel target = $region3
    $region8: #{tpu_custom_call.1} parent=1 // loop_exit
      _
    %3000 = vsyncpa [#allocation3], 1
    %s3001 = scalar_lea.sflag [#allocation3], 1
    %3002 = vsyncpa %s3001, 1
    %3003 = vsyncpa [#allocation5], 1

</llo_original>
